<compile_context>
chip_gen: v7x
topology: tpu7x:2x2x1
jax: 0.10.0
libtpu: 0.0.40
codegen_flags: <defaults>
</compile_context>

<pallas_src>
import functools

import numpy as np
import jax
import jax.numpy as jnp
from jax import lax
from jax.experimental import pallas as pl
from jax.experimental.pallas import tpu as pltpu


# ----------------------------------------------------------------------------
# Host-side construction of the exact linear operators (PyTorch semantics)
# ----------------------------------------------------------------------------
def adaptive_pool_matrix(in_size: int, out_size: int) -> np.ndarray:
    """Row i averages x[start:end] with PyTorch AdaptiveAvgPool bin rule."""
    P = np.zeros((out_size, in_size), np.float32)
    for i in range(out_size):
        start = (i * in_size) // out_size
        end = -(-((i + 1) * in_size) // out_size)  # ceil div
        P[i, start:end] = 1.0 / float(end - start)
    return P


def bilinear_matrix(out_size: int, in_size: int) -> np.ndarray:
    """1-D bilinear interpolation matrix, align_corners=True (PyTorch)."""
    U = np.zeros((out_size, in_size), np.float32)
    if in_size == 1:
        U[:, 0] = 1.0
        return U
    for j in range(out_size):
        coord = (j * (in_size - 1) / (out_size - 1)) if out_size > 1 else 0.0
        i0 = min(int(np.floor(coord)), in_size - 1)
        i1 = min(i0 + 1, in_size - 1)
        w1 = coord - i0
        U[j, i0] += 1.0 - w1
        U[j, i1] += w1
    return U


@functools.lru_cache(maxsize=None)
def _stacked_operators(H, W, height, width, pool_sizes, pp_pad, dtype_name):
    """Cached big operators: pt (pp_pad, H*W) pool rows, ut (pp_pad, HWo) upsample rows."""
    pt = np.zeros((pp_pad, H * W), np.float32)
    ut = np.zeros((pp_pad, height * width), np.float32)
    off = 0
    for p in pool_sizes:
        P = np.kron(adaptive_pool_matrix(H, p), adaptive_pool_matrix(W, p))   # (p*p, HW)
        U = np.kron(bilinear_matrix(height, p), bilinear_matrix(width, p))    # (HWo, p*p)
        pp = p * p
        pt[off:off + pp, :] = P
        ut[off:off + pp, :] = U.T
        off += pp
    dt = jnp.dtype(dtype_name)
    return jnp.asarray(pt, dtype=dt), jnp.asarray(ut, dtype=dt)


def _mxu_m_rows():
    """MXU M-dim fill target: 256 on v6e/v7x, 128 on older generations."""
    try:
        kind = jax.devices()[0].device_kind.lower()
    except Exception:
        return 256
    if any(t in kind for t in ("v2", "v3", "v4", "v5")):
        return 128
    return 256


def _physical_vmem_bytes():
    try:
        return int(pltpu.get_tpu_info().vmem_capacity_bytes)
    except Exception:
        return 64 << 20  # conservative (v7x per-TC VMEM)


# ----------------------------------------------------------------------------
# Fused Pallas kernel: all branches + passthrough concat, grid over batch tiles
# ----------------------------------------------------------------------------
def _make_kernel(bt, C, nbO, HW, HWo, compute_dtype):
    def kernel(x_ref, pt_ref, wbd_ref, shift_ref, mask_ref, ut_ref, o_ref):
        # x_ref:     (bt, C, HW)          batch tile, channels x flat spatial (f32)
        # pt_ref:    (PPpad, HW)          HW-major stacked adaptive-pool operators
        # wbd_ref:   (bt*nbO, bt*C)       kron(I_bt, scale*W) block-diag 1x1 conv
        # shift_ref: (bt*nbO, 1)          fused BN shift (beta - mean*scale), f32
        # mask_ref:  (bt*nbO, PPpad)      1 on own-branch pooled columns, f32
        # ut_ref:    (PPpad, HWo)         stacked bilinear operators (transposed)
        # o_ref:     (bt, C + nbO, HWo)   [x, branch_0..branch_{nb-1}]
        x = x_ref[...]                                              # (bt, C, HW) f32
        xc = x.reshape(bt * C, HW).astype(compute_dtype)

        # 1) adaptive avg-pool of every branch at once: contract HW (lane dim
        #    of both operands) == x @ pt^T, one MXU matmul, dense operator tile.
        pooled = lax.dot_general(
            xc, pt_ref[...],
            dimension_numbers=(((1,), (1,)), ((), ())),
            preferred_element_type=jnp.float32)                     # (bt*C, PPpad)

        # 2) 1x1 conv (BN scale pre-folded) for all batch rows / branches.
        conv = jnp.dot(wbd_ref[...], pooled.astype(compute_dtype),
                       preferred_element_type=jnp.float32)          # (bt*nbO, PPpad)

        # 3) BN shift + ReLU; mask zeroes cross-branch / padded pooled columns.
        act = jnp.maximum(conv + shift_ref[...], 0.0) * mask_ref[...]

        # 4) bilinear (align_corners=True) upsample of every branch (one matmul).
        up = jnp.dot(act.astype(compute_dtype), ut_ref[...],
                     preferred_element_type=jnp.float32)            # (bt*nbO, HWo)

        # 5) emit the concatenated channel layout directly (sublane-aligned splits).
        o_ref[:, :C, :] = x.astype(o_ref.dtype)
        o_ref[:, C:, :] = up.reshape(bt, nbO, HWo).astype(o_ref.dtype)

    return kernel


# ----------------------------------------------------------------------------
# PyramidPooling forward
# ----------------------------------------------------------------------------
def pyramid_pooling(x, params, pool_sizes, height, width, compute_dtype=jnp.bfloat16):
    """x: (B, C, H, W) float32 NCHW -> (B, C + nb*O, height, width)."""
    B, C, H, W = x.shape
    pool_sizes = tuple(int(p) for p in pool_sizes)
    nb = len(pool_sizes)
    # torch.cat([x, out1..]) in the reference requires matching spatial dims.
    assert (H, W) == (height, width), "PyramidPooling requires (H, W) == (height, width)"
    assert C % nb == 0, "in_channels must be divisible by len(pool_sizes)"
    assert C % 8 == 0, "in_channels must be a multiple of 8 (TPU sublane alignment)"
    O = C // nb
    nbO = nb * O  # == C
    Ctot = C + nbO
    HW = H * W
    HWo = height * width
    eps = 1e-5  # BatchNorm2d default (eval mode)

    pp_sizes = tuple(p * p for p in pool_sizes)
    PPsum = sum(pp_sizes)
    PPpad = -(-PPsum // 64) * 64  # lane/sublane-aligned padded pooled axis (zeros: exact)

    cdt = jnp.dtype(compute_dtype)
    csize = cdt.itemsize

    # --- stacked exact linear operators (cached + uploaded once) -------------
    pt_dev, ut_dev = _stacked_operators(H, W, height, width, pool_sizes, PPpad, cdt.name)

    # --- fold BN scale into conv weights; branch-column mask -----------------
    w_rows, shift_rows = [], []
    for (w, gamma, beta, mean, var) in params:
        scale = gamma / jnp.sqrt(var + eps)                 # (O,)
        w_rows.append(w * scale[:, None])                   # (O, C) scaled weight
        shift_rows.append((beta - mean * scale)[:, None])   # (O, 1)
    w_stack = jnp.concatenate(w_rows, axis=0)               # (nbO, C)
    shift_stack = jnp.concatenate(shift_rows, axis=0)       # (nbO, 1)

    mask_np = np.zeros((nbO, PPpad), np.float32)
    off = 0
    for b, pp in enumerate(pp_sizes):
        mask_np[b * O:(b + 1) * O, off:off + pp] = 1.0
        off += pp

    # --- batch tiling: fill MXU M dim, keep >=2 grid steps, fit VMEM budget ---
    phys = _physical_vmem_bytes()
    budget = phys - (16 << 20)

    def vmem_need(bt):  # worst case: double-buffered I/O and operators
        xb = 4 * bt * C * HW
        ob = 4 * bt * Ctot * HWo
        ops = csize * (PPpad * HW + PPpad * HWo + (bt * nbO) * (bt * C)) \
            + 4 * (bt * nbO) * (1 + PPpad)
        inter = 4 * (bt * C * PPpad + 3 * bt * nbO * PPpad + bt * nbO * HWo) \
            + csize * (bt * C * HW + bt * nbO * (HWo + PPpad))
        return 2 * (xb + ob) + 2 * ops + inter

    cap = max(1, _mxu_m_rows() // max(C, 1))
    divisors = [d for d in range(1, B + 1) if B % d == 0]
    cands = [d for d in divisors if d <= cap and vmem_need(d) <= budget]
    if not cands:
        cands = [1]  # TODO(synk): add HWo spatial tiling if even bt=1 exceeds VMEM
    multi = [d for d in cands if B // d >= 2]
    bt = max(multi) if (multi and B >= 2) else max(cands)

    w_bd = jnp.kron(jnp.eye(bt, dtype=jnp.float32), w_stack).astype(cdt)    # (bt*nbO, bt*C)
    shift_t = jnp.tile(shift_stack, (bt, 1)).astype(jnp.float32)            # (bt*nbO, 1)
    mask_t = jnp.asarray(np.tile(mask_np, (bt, 1)))                         # (bt*nbO, PPpad)

    x_flat = x.reshape(B, C, HW)

    vmem_limit = int(min(max(vmem_need(bt) + (4 << 20), 32 << 20), phys - (4 << 20)))

    def run(use_buffered):
        def const_spec(shape):
            idx = lambda g: (0,) * len(shape)
            if use_buffered:
                return pl.BlockSpec(shape, idx, pipeline_mode=pl.Buffered(1))
            return pl.BlockSpec(shape, idx)

        in_specs = [
            pl.BlockSpec((bt, C, HW), lambda g: (g, 0, 0)),
            const_spec((PPpad, HW)),
            const_spec((bt * nbO, bt * C)),
            const_spec((bt * nbO, 1)),
            const_spec((bt * nbO, PPpad)),
            const_spec((PPpad, HWo)),
        ]
        return pl.pallas_call(
            _make_kernel(bt, C, nbO, HW, HWo, cdt),
            out_shape=jax.ShapeDtypeStruct((B, Ctot, HWo), x.dtype),
            grid=(B // bt,),
            in_specs=in_specs,
            out_specs=pl.BlockSpec((bt, Ctot, HWo), lambda g: (g, 0, 0)),
            compiler_params=pltpu.CompilerParams(
                dimension_semantics=("parallel",),
                vmem_limit_bytes=vmem_limit,
            ),
        )(x_flat, pt_dev, w_bd, shift_t, mask_t, ut_dev)

    try:
        out = run(True)           # single-buffered grid-invariant operators
    except Exception:
        out = run(False)          # fallback if pipeline_mode/Buffered(1) unsupported

    return out.reshape(B, Ctot, height, width)


# ----------------------------------------------------------------------------
# Pure-JAX reference (test harness only — NOT part of the production forward)
# ----------------------------------------------------------------------------
def _reference(x, params, pool_sizes, height, width):
    B, C, H, W = x.shape
    eps = 1e-5
    xf = x.reshape(B, C, H * W)
    outs = [x]
    for (w, gamma, beta, mean, var), p in zip(params, pool_sizes):
        P2 = jnp.asarray(np.kron(adaptive_pool_matrix(H, p), adaptive_pool_matrix(W, p)))
        U2 = jnp.asarray(np.kron(bilinear_matrix(height, p), bilinear_matrix(width, p)))
        pooled = jnp.einsum("bcs,ps->bcp", xf, P2)
        conv = jnp.einsum("oc,bcp->bop", w, pooled)
        scale = gamma / jnp.sqrt(var + eps)
        bn = conv * scale[None, :, None] + (beta - mean * scale)[None, :, None]
        act = jnp.maximum(bn, 0.0)
        up = jnp.einsum("bop,tp->bot", act, U2)
        outs.append(up.reshape(B, w.shape[0], height, width))
    return jnp.concatenate(outs, axis=1)


if __name__ == "__main__":
    B, C, H, W = 2, 8, 16, 16
    pool_sizes = (6, 3, 2, 1)
    height, width = 16, 16
    O = C // len(pool_sizes)  # out_channels per branch = 2

    key = jax.random.PRNGKey(0)
    keys = jax.random.split(key, 1 + 5 * len(pool_sizes))
    x = jax.random.normal(keys[0], (B, C, H, W), dtype=jnp.float32)

    # Deterministic per-branch parameters: conv weight (O, C), BN gamma/beta/mean/var (O,)
    params = []
    for i in range(len(pool_sizes)):
        kw, kg, kb, km, kv = keys[1 + 5 * i: 1 + 5 * (i + 1)]
        wconv = 0.3 * jax.random.normal(kw, (O, C), dtype=jnp.float32)
        gamma = 1.0 + 0.1 * jax.random.normal(kg, (O,), dtype=jnp.float32)
        beta = 0.1 * jax.random.normal(kb, (O,), dtype=jnp.float32)
        mean = 0.1 * jax.random.normal(km, (O,), dtype=jnp.float32)
        var = 1.0 + 0.1 * jax.nn.softplus(jax.random.normal(kv, (O,), dtype=jnp.float32))
        params.append((wconv, gamma, beta, mean, var))

    ref = jax.block_until_ready(_reference(x, params, pool_sizes, height, width))

    # Default fast path (bf16 operands, f32 accumulation): passthrough channels
    # are bit-exact; branch channels within bf16 rounding of the reference.
    out = jax.block_until_ready(pyramid_pooling(x, params, pool_sizes, height, width))
    assert out.shape == (B, C + len(pool_sizes) * O, height, width), out.shape
    np.testing.assert_array_equal(np.asarray(out[:, :C]), np.asarray(x))
    np.testing.assert_allclose(np.asarray(out[:, C:]), np.asarray(ref[:, C:]),
                               rtol=5e-2, atol=5e-2)

    # Exact path (f32 compute) matches the reference tightly.
    out_f32 = jax.block_until_ready(
        pyramid_pooling(x, params, pool_sizes, height, width, compute_dtype=jnp.float32))
    np.testing.assert_allclose(np.asarray(out_f32), np.asarray(ref), rtol=1e-4, atol=1e-5)

    print("KERNEL_OK")
</pallas_src>

<mosaic_0001>
module attributes {stable_mosaic.version = 11 : i64} {
  func.func @kernel(%arg0: i32, %arg1: memref<1x8x256xf32, #tpu.memory_space<vmem>>, %arg2: memref<64x256xbf16, #tpu.memory_space<vmem>>, %arg3: memref<8x8xbf16, #tpu.memory_space<vmem>>, %arg4: memref<8x1xf32, #tpu.memory_space<vmem>>, %arg5: memref<8x64xf32, #tpu.memory_space<vmem>>, %arg6: memref<64x256xbf16, #tpu.memory_space<vmem>>, %arg7: memref<1x16x256xf32, #tpu.memory_space<vmem>>) attributes {dimension_semantics = [#tpu.dimension_semantics<parallel>], iteration_bounds = array<i64: 2>, scalar_prefetch = 0 : i64, scratch_operands = 0 : i64, tpu.core_type = #tpu.core_type<tc>, window_params = [{transform_indices = @transform_0, window_bounds = array<i64: 1, 8, 256>}, {pipeline_mode = #tpu.pipeline_mode<synchronous>, transform_indices = @transform_1, window_bounds = array<i64: 64, 256>}, {pipeline_mode = #tpu.pipeline_mode<synchronous>, transform_indices = @transform_2, window_bounds = array<i64: 8, 8>}, {pipeline_mode = #tpu.pipeline_mode<synchronous>, transform_indices = @transform_3, window_bounds = array<i64: 8, 1>}, {pipeline_mode = #tpu.pipeline_mode<synchronous>, transform_indices = @transform_4, window_bounds = array<i64: 8, 64>}, {pipeline_mode = #tpu.pipeline_mode<synchronous>, transform_indices = @transform_5, window_bounds = array<i64: 64, 256>}, {transform_indices = @transform_6, window_bounds = array<i64: 1, 16, 256>}]} {
    %c0 = arith.constant 0 : index
    %c0_0 = arith.constant 0 : index
    %c0_1 = arith.constant 0 : index
    %0 = vector.load %arg1[%c0, %c0_0, %c0_1] : memref<1x8x256xf32, #tpu.memory_space<vmem>>, vector<1x8x256xf32>
    %1 = vector.shape_cast %0 : vector<1x8x256xf32> to vector<8x256xf32>
    %2 = arith.truncf %1 : vector<8x256xf32> to vector<8x256xbf16>
    %c0_2 = arith.constant 0 : index
    %c0_3 = arith.constant 0 : index
    %3 = vector.load %arg2[%c0_2, %c0_3] : memref<64x256xbf16, #tpu.memory_space<vmem>>, vector<64x256xbf16>
    %cst = arith.constant dense<0.000000e+00> : vector<8x64xf32>
    %4 = tpu.matmul %2, %3, %cst {dimension_numbers = #tpu.dot_dimension_numbers<[1], [1], [0], [0], [0, 0, 1, 0], [], []>} : vector<8x256xbf16>, vector<64x256xbf16>, vector<8x64xf32> -> vector<8x64xf32>
    %c0_4 = arith.constant 0 : index
    %c0_5 = arith.constant 0 : index
    %5 = vector.load %arg3[%c0_4, %c0_5] : memref<8x8xbf16, #tpu.memory_space<vmem>>, vector<8x8xbf16>
    %6 = arith.truncf %4 : vector<8x64xf32> to vector<8x64xbf16>
    %cst_6 = arith.constant dense<0.000000e+00> : vector<8x64xf32>
    %7 = tpu.matmul %5, %6, %cst_6 {dimension_numbers = #tpu.dot_dimension_numbers<[1], [0], [0], [1], [0, 0, 1, 1], [], []>} : vector<8x8xbf16>, vector<8x64xbf16>, vector<8x64xf32> -> vector<8x64xf32>
    %c0_7 = arith.constant 0 : index
    %c0_8 = arith.constant 0 : index
    %8 = vector.load %arg4[%c0_7, %c0_8] : memref<8x1xf32, #tpu.memory_space<vmem>>, vector<8x1xf32>
    %9 = vector.broadcast %8 : vector<8x1xf32> to vector<8x64xf32>
    %10 = arith.addf %7, %9 : vector<8x64xf32>
    %cst_9 = arith.constant 0.000000e+00 : f32
    %11 = vector.broadcast %cst_9 : f32 to vector<8x64xf32>
    %12 = arith.maximumf %10, %11 : vector<8x64xf32>
    %c0_10 = arith.constant 0 : index
    %c0_11 = arith.constant 0 : index
    %13 = vector.load %arg5[%c0_10, %c0_11] : memref<8x64xf32, #tpu.memory_space<vmem>>, vector<8x64xf32>
    %14 = arith.mulf %12, %13 : vector<8x64xf32>
    %15 = arith.truncf %14 : vector<8x64xf32> to vector<8x64xbf16>
    %c0_12 = arith.constant 0 : index
    %c0_13 = arith.constant 0 : index
    %16 = vector.load %arg6[%c0_12, %c0_13] : memref<64x256xbf16, #tpu.memory_space<vmem>>, vector<64x256xbf16>
    %cst_14 = arith.constant dense<0.000000e+00> : vector<8x256xf32>
    %17 = tpu.matmul %15, %16, %cst_14 {dimension_numbers = #tpu.dot_dimension_numbers<[1], [0], [0], [1], [0, 0, 1, 1], [], []>} : vector<8x64xbf16>, vector<64x256xbf16>, vector<8x256xf32> -> vector<8x256xf32>
    %c0_15 = arith.constant 0 : index
    %c0_16 = arith.constant 0 : index
    %c0_17 = arith.constant 0 : index
    %18 = vector.load %arg7[%c0_15, %c0_16, %c0_17] : memref<1x16x256xf32, #tpu.memory_space<vmem>>, vector<1x8x256xf32>
    tpu.vector_store %arg7[%c0_15, %c0_16, %c0_17], %0 {strides = array<i32>} : memref<1x16x256xf32, #tpu.memory_space<vmem>>, vector<1x8x256xf32>,
    %19 = vector.shape_cast %17 : vector<8x256xf32> to vector<1x8x256xf32>
    %c0_18 = arith.constant 0 : index
    %c8 = arith.constant 8 : index
    %c0_19 = arith.constant 0 : index
    %20 = vector.load %arg7[%c0_18, %c8, %c0_19] : memref<1x16x256xf32, #tpu.memory_space<vmem>>, vector<1x8x256xf32>
    tpu.vector_store %arg7[%c0_18, %c8, %c0_19], %19 {strides = array<i32>} : memref<1x16x256xf32, #tpu.memory_space<vmem>>, vector<1x8x256xf32>,
    return
  }
  func.func @transform_0(%arg0: i32) -> (i32, i32, i32) {
    %c0_i32 = arith.constant 0 : i32
    %c0_i32_0 = arith.constant 0 : i32
    %c0_i32_1 = arith.constant 0 : i32
    return %arg0, %c0_i32, %c0_i32_0 : i32, i32, i32
  }
  func.func @transform_1(%arg0: i32) -> (i32, i32) {
    %c0_i32 = arith.constant 0 : i32
    %c0_i32_0 = arith.constant 0 : i32
    %c0_i32_1 = arith.constant 0 : i32
    return %c0_i32, %c0_i32_0 : i32, i32
  }
  func.func @transform_2(%arg0: i32) -> (i32, i32) {
    %c0_i32 = arith.constant 0 : i32
    %c0_i32_0 = arith.constant 0 : i32
    %c0_i32_1 = arith.constant 0 : i32
    return %c0_i32, %c0_i32_0 : i32, i32
  }
  func.func @transform_3(%arg0: i32) -> (i32, i32) {
    %c0_i32 = arith.constant 0 : i32
    %c0_i32_0 = arith.constant 0 : i32
    %c0_i32_1 = arith.constant 0 : i32
    return %c0_i32, %c0_i32_0 : i32, i32
  }
  func.func @transform_4(%arg0: i32) -> (i32, i32) {
    %c0_i32 = arith.constant 0 : i32
    %c0_i32_0 = arith.constant 0 : i32
    %c0_i32_1 = arith.constant 0 : i32
    return %c0_i32, %c0_i32_0 : i32, i32
  }
  func.func @transform_5(%arg0: i32) -> (i32, i32) {
    %c0_i32 = arith.constant 0 : i32
    %c0_i32_0 = arith.constant 0 : i32
    %c0_i32_1 = arith.constant 0 : i32
    return %c0_i32, %c0_i32_0 : i32, i32
  }
  func.func @transform_6(%arg0: i32) -> (i32, i32, i32) {
    %c0_i32 = arith.constant 0 : i32
    %c0_i32_0 = arith.constant 0 : i32
    %c0_i32_1 = arith.constant 0 : i32
    return %arg0, %c0_i32, %c0_i32_0 : i32, i32, i32
  }
}

module attributes {stable_mosaic.version = 11 : i64} {
  func.func @kernel(%arg0: i32, %arg1: memref<1x8x256xf32, #tpu.memory_space<vmem>>, %arg2: memref<64x256xbf16, #tpu.memory_space<vmem>>, %arg3: memref<8x8xbf16, #tpu.memory_space<vmem>>, %arg4: memref<8x1xf32, #tpu.memory_space<vmem>>, %arg5: memref<8x64xf32, #tpu.memory_space<vmem>>, %arg6: memref<64x256xbf16, #tpu.memory_space<vmem>>, %arg7: memref<1x16x256xf32, #tpu.memory_space<vmem>>) attributes {dimension_semantics = [#tpu.dimension_semantics<parallel>], iteration_bounds = array<i64: 2>, scalar_prefetch = 0 : i64, scratch_operands = 0 : i64, tpu.core_type = #tpu.core_type<tc>, window_params = [{transform_indices = @transform_0, window_bounds = array<i64: 1, 8, 256>}, {pipeline_mode = #tpu.pipeline_mode<synchronous>, transform_indices = @transform_1, window_bounds = array<i64: 64, 256>}, {pipeline_mode = #tpu.pipeline_mode<synchronous>, transform_indices = @transform_2, window_bounds = array<i64: 8, 8>}, {pipeline_mode = #tpu.pipeline_mode<synchronous>, transform_indices = @transform_3, window_bounds = array<i64: 8, 1>}, {pipeline_mode = #tpu.pipeline_mode<synchronous>, transform_indices = @transform_4, window_bounds = array<i64: 8, 64>}, {pipeline_mode = #tpu.pipeline_mode<synchronous>, transform_indices = @transform_5, window_bounds = array<i64: 64, 256>}, {transform_indices = @transform_6, window_bounds = array<i64: 1, 16, 256>}]} {
    %c0 = arith.constant 0 : index
    %c0_0 = arith.constant 0 : index
    %c0_1 = arith.constant 0 : index
    %0 = vector.load %arg1[%c0, %c0_0, %c0_1] : memref<1x8x256xf32, #tpu.memory_space<vmem>>, vector<1x8x256xf32>
    %1 = vector.shape_cast %0 : vector<1x8x256xf32> to vector<8x256xf32>
    %2 = arith.truncf %1 : vector<8x256xf32> to vector<8x256xbf16>
    %c0_2 = arith.constant 0 : index
    %c0_3 = arith.constant 0 : index
    %3 = vector.load %arg2[%c0_2, %c0_3] : memref<64x256xbf16, #tpu.memory_space<vmem>>, vector<64x256xbf16>
    %cst = arith.constant dense<0.000000e+00> : vector<8x64xf32>
    %4 = tpu.matmul %2, %3, %cst {dimension_numbers = #tpu.dot_dimension_numbers<[1], [1], [0], [0], [0, 0, 1, 0], [], []>} : vector<8x256xbf16>, vector<64x256xbf16>, vector<8x64xf32> -> vector<8x64xf32>
    %c0_4 = arith.constant 0 : index
    %c0_5 = arith.constant 0 : index
    %5 = vector.load %arg3[%c0_4, %c0_5] : memref<8x8xbf16, #tpu.memory_space<vmem>>, vector<8x8xbf16>
    %6 = arith.truncf %4 : vector<8x64xf32> to vector<8x64xbf16>
    %cst_6 = arith.constant dense<0.000000e+00> : vector<8x64xf32>
    %7 = tpu.matmul %5, %6, %cst_6 {dimension_numbers = #tpu.dot_dimension_numbers<[1], [0], [0], [1], [0, 0, 1, 1], [], []>} : vector<8x8xbf16>, vector<8x64xbf16>, vector<8x64xf32> -> vector<8x64xf32>
    %c0_7 = arith.constant 0 : index
    %c0_8 = arith.constant 0 : index
    %8 = vector.load %arg4[%c0_7, %c0_8] : memref<8x1xf32, #tpu.memory_space<vmem>>, vector<8x1xf32>
    %9 = vector.broadcast %8 : vector<8x1xf32> to vector<8x64xf32>
    %10 = arith.addf %7, %9 : vector<8x64xf32>
    %cst_9 = arith.constant 0.000000e+00 : f32
    %11 = vector.broadcast %cst_9 : f32 to vector<8x64xf32>
    %12 = arith.maximumf %10, %11 : vector<8x64xf32>
    %c0_10 = arith.constant 0 : index
    %c0_11 = arith.constant 0 : index
    %13 = vector.load %arg5[%c0_10, %c0_11] : memref<8x64xf32, #tpu.memory_space<vmem>>, vector<8x64xf32>
    %14 = arith.mulf %12, %13 : vector<8x64xf32>
    %15 = arith.truncf %14 : vector<8x64xf32> to vector<8x64xbf16>
    %c0_12 = arith.constant 0 : index
    %c0_13 = arith.constant 0 : index
    %16 = vector.load %arg6[%c0_12, %c0_13] : memref<64x256xbf16, #tpu.memory_space<vmem>>, vector<64x256xbf16>
    %cst_14 = arith.constant dense<0.000000e+00> : vector<8x256xf32>
    %17 = tpu.matmul %15, %16, %cst_14 {dimension_numbers = #tpu.dot_dimension_numbers<[1], [0], [0], [1], [0, 0, 1, 1], [], []>} : vector<8x64xbf16>, vector<64x256xbf16>, vector<8x256xf32> -> vector<8x256xf32>
    %c0_15 = arith.constant 0 : index
    %c0_16 = arith.constant 0 : index
    %c0_17 = arith.constant 0 : index
    %18 = vector.load %arg7[%c0_15, %c0_16, %c0_17] : memref<1x16x256xf32, #tpu.memory_space<vmem>>, vector<1x8x256xf32>
    tpu.vector_store %arg7[%c0_15, %c0_16, %c0_17], %0 {strides = array<i32>} : memref<1x16x256xf32, #tpu.memory_space<vmem>>, vector<1x8x256xf32>,
    %19 = vector.shape_cast %17 : vector<8x256xf32> to vector<1x8x256xf32>
    %c0_18 = arith.constant 0 : index
    %c8 = arith.constant 8 : index
    %c0_19 = arith.constant 0 : index
    %20 = vector.load %arg7[%c0_18, %c8, %c0_19] : memref<1x16x256xf32, #tpu.memory_space<vmem>>, vector<1x8x256xf32>
    tpu.vector_store %arg7[%c0_18, %c8, %c0_19], %19 {strides = array<i32>} : memref<1x16x256xf32, #tpu.memory_space<vmem>>, vector<1x8x256xf32>,
    return
  }
  func.func @transform_0(%arg0: i32) -> (i32, i32, i32) {
    %c0_i32 = arith.constant 0 : i32
    %c0_i32_0 = arith.constant 0 : i32
    %c0_i32_1 = arith.constant 0 : i32
    return %arg0, %c0_i32, %c0_i32_0 : i32, i32, i32
  }
  func.func @transform_1(%arg0: i32) -> (i32, i32) {
    %c0_i32 = arith.constant 0 : i32
    %c0_i32_0 = arith.constant 0 : i32
    %c0_i32_1 = arith.constant 0 : i32
    return %c0_i32, %c0_i32_0 : i32, i32
  }
  func.func @transform_2(%arg0: i32) -> (i32, i32) {
    %c0_i32 = arith.constant 0 : i32
    %c0_i32_0 = arith.constant 0 : i32
    %c0_i32_1 = arith.constant 0 : i32
    return %c0_i32, %c0_i32_0 : i32, i32
  }
  func.func @transform_3(%arg0: i32) -> (i32, i32) {
    %c0_i32 = arith.constant 0 : i32
    %c0_i32_0 = arith.constant 0 : i32
    %c0_i32_1 = arith.constant 0 : i32
    return %c0_i32, %c0_i32_0 : i32, i32
  }
  func.func @transform_4(%arg0: i32) -> (i32, i32) {
    %c0_i32 = arith.constant 0 : i32
    %c0_i32_0 = arith.constant 0 : i32
    %c0_i32_1 = arith.constant 0 : i32
    return %c0_i32, %c0_i32_0 : i32, i32
  }
  func.func @transform_5(%arg0: i32) -> (i32, i32) {
    %c0_i32 = arith.constant 0 : i32
    %c0_i32_0 = arith.constant 0 : i32
    %c0_i32_1 = arith.constant 0 : i32
    return %c0_i32, %c0_i32_0 : i32, i32
  }
  func.func @transform_6(%arg0: i32) -> (i32, i32, i32) {
    %c0_i32 = arith.constant 0 : i32
    %c0_i32_0 = arith.constant 0 : i32
    %c0_i32_1 = arith.constant 0 : i32
    return %arg0, %c0_i32, %c0_i32_0 : i32, i32, i32
  }
}

</mosaic_0001>

<llo_original>
// kernel: tpu_custom_call.1
$region0: #{tpu_custom_call.1}
  #allocation0 [shape = 'u32[]', space=smem, size = 0x4, offset = 0x4, fixed_abs, tag = 'smem constant byte address 0x4 - core index']
  #allocation1 [shape = 'u32[144,128]{1,0:T(1,128)}', space=vmem, size = 0x12000, scoped, tag = 'internal scratch']
  %s0 = inlined_call_operand.hbm [shape: f32[2,8,256], index: 0, kind: input, shape index: {}]
  %s1 = inlined_call_operand.hbm [shape: bf16[64,256], index: 1, kind: input, shape index: {}]
  %s2 = inlined_call_operand.vmem [shape: bf16[8,8], index: 2, kind: input, shape index: {}]
  %s3 = inlined_call_operand.vmem [shape: f32[8,1], index: 3, kind: input, shape index: {}]
  %s4 = inlined_call_operand.vmem [shape: f32[8,64], index: 4, kind: input, shape index: {}]
  %s5 = inlined_call_operand.hbm [shape: bf16[64,256], index: 5, kind: input, shape index: {}]
  %s6 = inlined_call_operand.hbm [shape: f32[2,16,256], index: 6, kind: output, shape index: {}]
  %s7 = sld [smem:[#allocation0]]
  $region69: #{tpu_custom_call.1} parent=0
    _
  %s9 = ssub.s32 1, %s7
  %s10 = scalar_select 0, %s9, %s7
  $region1: #{tpu_custom_call.1} parent=0
    #allocation2 [shape = 'u8[16384]{0}', space=vmem, size = 0x4000, scoped, tag = 'input window, operand 0']
    #allocation3 [shape = 's32[2]{0}', space=sflag, size = 0x8, scoped, tag = 'scoped memory for tpu_custom_call.1']
    #allocation4 [shape = 's32[2]{0}', space=sflag, size = 0x8, scoped, tag = 'scoped memory for tpu_custom_call.1']
    #allocation5 [shape = 'u8[32768]{0}', space=vmem, size = 0x8000, scoped, tag = 'input window, operand 1, single buffered']
    #allocation6 [shape = 's32[1]{0}', space=sflag, size = 0x4, scoped, tag = 'scoped memory for tpu_custom_call.1']
    #allocation7 [shape = 'u8[32768]{0}', space=vmem, size = 0x8000, scoped, tag = 'input window, operand 5, single buffered']
    #allocation8 [shape = 'u8[32768]{0}', space=vmem, size = 0x8000, scoped, tag = 'output window, operand 0']
    %11 = vsyncpa [#allocation3], 0
    %s12 = scalar_lea.sflag [#allocation3], 1
    %13 = vsyncpa %s12, 0
    %14 = vsyncpa [#allocation6], 0
    %15 = vsyncpa [#allocation4], 0
    %s16 = scalar_lea.sflag [#allocation4], 1
    %17 = vsyncpa %s16, 0
    loop: start=0, step=1, limit=4
    $region2: #{tpu_custom_call.1} parent=1 // loop_pre_header
      _
    $region3: #{tpu_custom_call.1} parent=1 // loop_header
      %s19 = sphi 0, %s23
      %p20 = scmp.ge.s32.totalorder %s19, 4
      %s29 = sphi 0, %s31
      %s32 = sphi 0, %s29
      %s33 = sphi 0, %s32
      %s49 = sphi 0, %s33
      %s53 = sphi 0, %s53
      %s55 = sphi 0, %s53
      %s56 = sphi 0, %s55
      %s70 = sphi 0, %s56
      %s74 = sphi 0, %s74
      %s76 = sphi 0, %s74
      %s77 = sphi 0, %s76
      %s91 = sphi 0, %s77
      %s95 = sphi 0, %s95
      %s97 = sphi 0, %s95
      %s98 = sphi 0, %s97
      %s112 = sphi 0, %s98
      %s116 = sphi 0, %s116
      %s118 = sphi 0, %s116
      %s119 = sphi 0, %s118
      %s133 = sphi 0, %s119
      %s137 = sphi 0, %s137
      %s139 = sphi 0, %s137
      %s140 = sphi 0, %s139
      %s154 = sphi 0, %s140
      %s160 = sphi 0, %s162
      %s163 = sphi 0, %s160
      %s164 = sphi 0, %s163
      %s180 = sphi 0, %s164
    $region4: #{tpu_custom_call.1} parent=1 // loop_header_branch
      %22 = sbr.rel (%p20) target = $region8
    $region5: #{tpu_custom_call.1} parent=1 // loop_body
      %s24 = ssub.s32 %s19, 1
      %s25 = ssub.s32 %s19, 2
      %s26 = sadd.s32 %s19, 1
      %s27 = ssub.s32 %s19, %s26
      %p28 = scmp.eq.s32.totalorder %s27, 0
      %s30 = sadd.s32 %s29, 1
      %s31 = scalar_select %p28, %s29, %s30
      %p34 = pneg %p28
      %p35 = scmp.eq.s32.totalorder %s19, 1
      %p36 = por %p34, %p35
      %p37 = scmp.ne.s32.totalorder %s29, %s32
      %p38 = scmp.eq.s32.totalorder %s19, 0
      %p39 = por %p37, %p38
      %p40 = scmp.ne.s32.totalorder %s29, %s32
      %p41 = scmp.eq.s32.totalorder %s24, 1
      %p42 = por %p40, %p41
      %p43 = scmp.ne.s32.totalorder %s32, %s33
      %p44 = scmp.eq.s32.totalorder %s24, 0
      %p45 = por %p43, %p44
      %p46 = scmp.ne.s32.totalorder %s32, %s33
      %p47 = scmp.eq.s32.totalorder %s25, 1
      %p48 = por %p46, %p47
      %p50 = scmp.ne.s32.totalorder %s33, %s49
      %p51 = scmp.eq.s32.totalorder %s25, 0
      %p52 = por %p50, %p51
      %s54 = sadd.s32 %s53, 1
      %p57 = scmp.eq.s32.totalorder %s19, 1
      %p58 = scmp.ne.s32.totalorder %s53, %s55
      %p59 = scmp.eq.s32.totalorder %s19, 0
      %p60 = por %p58, %p59
      %p61 = scmp.ne.s32.totalorder %s53, %s55
      %p62 = scmp.eq.s32.totalorder %s24, 1
      %p63 = por %p61, %p62
      %p64 = scmp.ne.s32.totalorder %s55, %s56
      %p65 = scmp.eq.s32.totalorder %s24, 0
      %p66 = por %p64, %p65
      %p67 = scmp.ne.s32.totalorder %s55, %s56
      %p68 = scmp.eq.s32.totalorder %s25, 1
      %p69 = por %p67, %p68
      %p71 = scmp.ne.s32.totalorder %s56, %s70
      %p72 = scmp.eq.s32.totalorder %s25, 0
      %p73 = por %p71, %p72
      %s75 = sadd.s32 %s74, 1
      %p78 = scmp.eq.s32.totalorder %s19, 1
      %p79 = scmp.ne.s32.totalorder %s74, %s76
      %p80 = scmp.eq.s32.totalorder %s19, 0
      %p81 = por %p79, %p80
      %p82 = scmp.ne.s32.totalorder %s74, %s76
      %p83 = scmp.eq.s32.totalorder %s24, 1
      %p84 = por %p82, %p83
      %p85 = scmp.ne.s32.totalorder %s76, %s77
      %p86 = scmp.eq.s32.totalorder %s24, 0
      %p87 = por %p85, %p86
      %p88 = scmp.ne.s32.totalorder %s76, %s77
      %p89 = scmp.eq.s32.totalorder %s25, 1
      %p90 = por %p88, %p89
      %p92 = scmp.ne.s32.totalorder %s77, %s91
      %p93 = scmp.eq.s32.totalorder %s25, 0
      %p94 = por %p92, %p93
      %s96 = sadd.s32 %s95, 1
      %p99 = scmp.eq.s32.totalorder %s19, 1
      %p100 = scmp.ne.s32.totalorder %s95, %s97
      %p101 = scmp.eq.s32.totalorder %s19, 0
      %p102 = por %p100, %p101
      %p103 = scmp.ne.s32.totalorder %s95, %s97
      %p104 = scmp.eq.s32.totalorder %s24, 1
      %p105 = por %p103, %p104
      %p106 = scmp.ne.s32.totalorder %s97, %s98
      %p107 = scmp.eq.s32.totalorder %s24, 0
      %p108 = por %p106, %p107
      %p109 = scmp.ne.s32.totalorder %s97, %s98
      %p110 = scmp.eq.s32.totalorder %s25, 1
      %p111 = por %p109, %p110
      %p113 = scmp.ne.s32.totalorder %s98, %s112
      %p114 = scmp.eq.s32.totalorder %s25, 0
      %p115 = por %p113, %p114
      %s117 = sadd.s32 %s116, 1
      %p120 = scmp.eq.s32.totalorder %s19, 1
      %p121 = scmp.ne.s32.totalorder %s116, %s118
      %p122 = scmp.eq.s32.totalorder %s19, 0
      %p123 = por %p121, %p122
      %p124 = scmp.ne.s32.totalorder %s116, %s118
      %p125 = scmp.eq.s32.totalorder %s24, 1
      %p126 = por %p124, %p125
      %p127 = scmp.ne.s32.totalorder %s118, %s119
      %p128 = scmp.eq.s32.totalorder %s24, 0
      %p129 = por %p127, %p128
      %p130 = scmp.ne.s32.totalorder %s118, %s119
      %p131 = scmp.eq.s32.totalorder %s25, 1
      %p132 = por %p130, %p131
      %p134 = scmp.ne.s32.totalorder %s119, %s133
      %p135 = scmp.eq.s32.totalorder %s25, 0
      %p136 = por %p134, %p135
      %s138 = sadd.s32 %s137, 1
      %p141 = scmp.eq.s32.totalorder %s19, 1
      %p142 = scmp.ne.s32.totalorder %s137, %s139
      %p143 = scmp.eq.s32.totalorder %s19, 0
      %p144 = por %p142, %p143
      %p145 = scmp.ne.s32.totalorder %s137, %s139
      %p146 = scmp.eq.s32.totalorder %s24, 1
      %p147 = por %p145, %p146
      %p148 = scmp.ne.s32.totalorder %s139, %s140
      %p149 = scmp.eq.s32.totalorder %s24, 0
      %p150 = por %p148, %p149
      %p151 = scmp.ne.s32.totalorder %s139, %s140
      %p152 = scmp.eq.s32.totalorder %s25, 1
      %p153 = por %p151, %p152
      %p155 = scmp.ne.s32.totalorder %s140, %s154
      %p156 = scmp.eq.s32.totalorder %s25, 0
      %p157 = por %p155, %p156
      %s158 = ssub.s32 %s19, %s26
      %p159 = scmp.eq.s32.totalorder %s158, 0
      %s161 = sadd.s32 %s160, 1
      %s162 = scalar_select %p159, %s160, %s161
      %p165 = pneg %p159
      %p166 = scmp.eq.s32.totalorder %s19, 1
      %p167 = por %p165, %p166
      %p168 = scmp.ne.s32.totalorder %s160, %s163
      %p169 = scmp.eq.s32.totalorder %s19, 0
      %p170 = por %p168, %p169
      %p171 = scmp.ne.s32.totalorder %s160, %s163
      %p172 = scmp.eq.s32.totalorder %s24, 1
      %p173 = por %p171, %p172
      %p174 = scmp.ne.s32.totalorder %s163, %s164
      %p175 = scmp.eq.s32.totalorder %s24, 0
      %p176 = por %p174, %p175
      %p177 = scmp.ne.s32.totalorder %s163, %s164
      %p178 = scmp.eq.s32.totalorder %s25, 1
      %p179 = por %p177, %p178
      %p181 = scmp.ne.s32.totalorder %s164, %s180
      %p182 = scmp.eq.s32.totalorder %s25, 0
      %p183 = por %p181, %p182
      %p184 = scmp.le.s32.totalorder 1, %s19
      %p185 = scmp.lt.s32.totalorder %s19, 3
      %p186 = pnand %p184, %p185
      %p187 = pneg %p186
      // Predicated region
      $region9: #{tpu_custom_call.1} parent=5 // pred_check
        _
      $region10: #{tpu_custom_call.1} parent=5 // pred_check_branch
        %189 = sbr.rel (%p186) target = $region12
      $region11: #{tpu_custom_call.1} parent=5 // pred_region
        %s190 = ssub.s32 %s19, 1
        // Predicated region
        $region13: #{tpu_custom_call.1} parent=11 // pred_check
          %p191 = pneg %p66
        $region14: #{tpu_custom_call.1} parent=11 // pred_check_branch
          %193 = sbr.rel (%p191) target = $region16
        $region15: #{tpu_custom_call.1} parent=11 // pred_region
          %s195 = ssub.s32 1024, 1024
          %196 = vsyncadd [#allocation6], %s195
          %s197 = sshll.u32 [#allocation5], 4
          %s198 = int_to_ptr.vmem [resolvable:$true] %s197
          %203 = dma.hbm_to_vmem [thread:$0]  %s1, 1024, %s198, [#allocation6], 128, 128, 8
        $region16: #{tpu_custom_call.1} parent=11 // pred_fallthru
          _
        // Predicated region
        $region17: #{tpu_custom_call.1} parent=11 // pred_check
          %p204 = pneg %p87
        $region18: #{tpu_custom_call.1} parent=11 // pred_check_branch
          %206 = sbr.rel (%p204) target = $region20
        $region19: #{tpu_custom_call.1} parent=11 // pred_region
          _
        $region20: #{tpu_custom_call.1} parent=11 // pred_fallthru
          _
        // Predicated region
        $region21: #{tpu_custom_call.1} parent=11 // pred_check
          %p207 = pneg %p108
        $region22: #{tpu_custom_call.1} parent=11 // pred_check_branch
          %209 = sbr.rel (%p207) target = $region24
        $region23: #{tpu_custom_call.1} parent=11 // pred_region
          _
        $region24: #{tpu_custom_call.1} parent=11 // pred_fallthru
          _
        // Predicated region
        $region25: #{tpu_custom_call.1} parent=11 // pred_check
          %p210 = pneg %p129
        $region26: #{tpu_custom_call.1} parent=11 // pred_check_branch
          %212 = sbr.rel (%p210) target = $region28
        $region27: #{tpu_custom_call.1} parent=11 // pred_region
          _
        $region28: #{tpu_custom_call.1} parent=11 // pred_fallthru
          _
        // Predicated region
        $region29: #{tpu_custom_call.1} parent=11 // pred_check
          %p213 = pneg %p150
        $region30: #{tpu_custom_call.1} parent=11 // pred_check_branch
          %215 = sbr.rel (%p213) target = $region32
        $region31: #{tpu_custom_call.1} parent=11 // pred_region
          %s217 = ssub.s32 1024, 1024
          %218 = vsyncadd [#allocation6], %s217
          %s219 = sshll.u32 [#allocation7], 4
          %s220 = int_to_ptr.vmem [resolvable:$true] %s219
          %225 = dma.hbm_to_vmem [thread:$0]  %s5, 1024, %s220, [#allocation6], 128, 128, 8
        $region32: #{tpu_custom_call.1} parent=11 // pred_fallthru
          _
      $region12: #{tpu_custom_call.1} parent=5 // pred_fallthru
        _
      %p226 = scmp.lt.s32.totalorder %s19, 2
      // Predicated region
      $region33: #{tpu_custom_call.1} parent=5 // pred_check
        %p227 = pneg %p226
      $region34: #{tpu_custom_call.1} parent=5 // pred_check_branch
        %229 = sbr.rel (%p227) target = $region36
      $region35: #{tpu_custom_call.1} parent=5 // pred_region
        // Predicated region
        $region37: #{tpu_custom_call.1} parent=35 // pred_check
          %p230 = pneg %p39
        $region38: #{tpu_custom_call.1} parent=35 // pred_check_branch
          %232 = sbr.rel (%p230) target = $region40
        $region39: #{tpu_custom_call.1} parent=35 // pred_region
          %s233 = sand.u32 %s29, 1
          %s234 = scalar_lea.sflag [#allocation3], %s233
          %s235 = sand.u32 %s29, 1
          %s236 = smul.addr %s235, 16
          %s237 = scalar_lea.vmem [#allocation2], %s236
          %s239 = ssub.s32 256, 256
          %240 = vsyncadd %s234, %s239
          %s241 = smul.addr %s19, 2
          %s242 = smul.addr %s241, 128
          %s243 = scalar_lea.hbm %s0, %s242
          %s245 = sshll.u32 %s237, 4
          %s246 = int_to_ptr.vmem [resolvable:$true] %s245
          %248 = dma.hbm_to_vmem [thread:$0]  %s243, 256, %s246, %s234
        $region40: #{tpu_custom_call.1} parent=35 // pred_fallthru
          _
      $region36: #{tpu_custom_call.1} parent=5 // pred_fallthru
        _
      %p249 = scmp.le.s32.totalorder 1, %s19
      %p250 = scmp.lt.s32.totalorder %s19, 3
      %p251 = pnand %p249, %p250
      %p252 = pneg %p251
      // Predicated region
      $region41: #{tpu_custom_call.1} parent=5 // pred_check
        _
      $region42: #{tpu_custom_call.1} parent=5 // pred_check_branch
        %254 = sbr.rel (%p251) target = $region44
      $region43: #{tpu_custom_call.1} parent=5 // pred_region
        %s255 = ssub.s32 %s19, 1
        %s256 = sand.u32 %s32, 1
        %s257 = scalar_lea.sflag [#allocation3], %s256
        %s258 = sand.u32 %s32, 1
        %s259 = smul.addr %s258, 16
        %s260 = scalar_lea.vmem [#allocation2], %s259
        // Predicated region
        $region45: #{tpu_custom_call.1} parent=43 // pred_check
          %p261 = pneg %p45
        $region46: #{tpu_custom_call.1} parent=43 // pred_check_branch
          %263 = sbr.rel (%p261) target = $region48
        $region47: #{tpu_custom_call.1} parent=43 // pred_region
          %264 = dma.done %s257, 256
        $region48: #{tpu_custom_call.1} parent=43 // pred_fallthru
          _
        // Predicated region
        $region49: #{tpu_custom_call.1} parent=43 // pred_check
          %p265 = pneg %p66
        $region50: #{tpu_custom_call.1} parent=43 // pred_check_branch
          %267 = sbr.rel (%p265) target = $region52
        $region51: #{tpu_custom_call.1} parent=43 // pred_region
          %268 = dma.done [#allocation6], 1024
        $region52: #{tpu_custom_call.1} parent=43 // pred_fallthru
          _
        // Predicated region
        $region53: #{tpu_custom_call.1} parent=43 // pred_check
          %p269 = pneg %p150
        $region54: #{tpu_custom_call.1} parent=43 // pred_check_branch
          %271 = sbr.rel (%p269) target = $region56
        $region55: #{tpu_custom_call.1} parent=43 // pred_region
          %272 = dma.done [#allocation6], 1024
        $region56: #{tpu_custom_call.1} parent=43 // pred_fallthru
          _
        %s273 = sand.u32 %s32, 1
        %s274 = scalar_lea.sflag [#allocation3], %s273
        %s275 = sand.u32 %s32, 1
        %s276 = smul.addr %s275, 16
        %s277 = scalar_lea.vmem [#allocation2], %s276
        %p278 = pneg %p45
        %p279 = pneg %p42
        %p280 = pneg %p66
        %p281 = pneg %p63
        %p282 = pneg %p87
        %p283 = pneg %p84
        %p284 = pneg %p108
        %p285 = pneg %p105
        %p286 = pneg %p129
        %p287 = pneg %p126
        %p288 = pneg %p150
        %p289 = pneg %p147
        %p290 = pneg %p176
        %p291 = pneg %p173
        %s292 = sand.u32 %s163, 1
        %s293 = scalar_lea.sflag [#allocation4], %s292
        %s294 = sand.u32 %s163, 1
        %s295 = smul.addr %s294, 32
        %s296 = scalar_lea.vmem [#allocation8], %s295
        %v298 = vld [vmem:[%s260] sm:$0xff]
        %v299 = vld [vmem:[%s260 + $0x8] sm:$0xff]
        %v300 = vpack.c.bf16 %v298, %v298
        %v301 = vpack.c.bf16 %v299, %v299
        %v302 = vld [vmem:[#allocation5] sm:$0xff]
        %v303 = vld [vmem:[#allocation5 + $0x8] sm:$0xff]
        %v304 = vld [vmem:[#allocation5 + $0x10] sm:$0xff]
        %v305 = vld [vmem:[#allocation5 + $0x18] sm:$0xff]
        %v306 = vld [vmem:[#allocation5 + $0x20] sm:$0xff]
        %v307 = vld [vmem:[#allocation5 + $0x28] sm:$0xff]
        %v308 = vld [vmem:[#allocation5 + $0x30] sm:$0xff]
        %v309 = vld [vmem:[#allocation5 + $0x38] sm:$0xff]
        %v318 = vunpack.c.l.b16 %v302
        %v319 = vunpack.c.h.b16 %v302
        %v320 = vunpack.c.l.b16 %v303
        %v321 = vunpack.c.h.b16 %v303
        %v322 = vunpack.c.l.b16 %v304
        %v323 = vunpack.c.h.b16 %v304
        %v324 = vunpack.c.l.b16 %v305
        %v325 = vunpack.c.h.b16 %v305
        %v326 = vunpack.c.l.b16 %v306
        %v327 = vunpack.c.h.b16 %v306
        %v328 = vunpack.c.l.b16 %v307
        %v329 = vunpack.c.h.b16 %v307
        %v330 = vunpack.c.l.b16 %v308
        %v331 = vunpack.c.h.b16 %v308
        %v332 = vunpack.c.l.b16 %v309
        %v333 = vunpack.c.h.b16 %v309
        %v334 = vpack.c.b16 %v320, %v318
        %v335 = vpack.c.b16 %v321, %v319
        %v336 = vpack.c.b16 %v324, %v322
        %v337 = vpack.c.b16 %v325, %v323
        %v338 = vpack.c.b16 %v328, %v326
        %v339 = vpack.c.b16 %v329, %v327
        %v340 = vpack.c.b16 %v332, %v330
        %v341 = vpack.c.b16 %v333, %v331
        %350 = vmatprep.subr.bf16.mxu0 %v335
        %351 = vmatpush1.bf16.xpose.msra.mxu0 %v334
        %352 = vmatprep.subr.bf16.mxu0 %v337
        %353 = vmatpush1.bf16.xpose.msra.mxu0 %v336
        %354 = vmatprep.subr.bf16.mxu0 %v339
        %355 = vmatpush1.bf16.xpose.msra.mxu0 %v338
        %356 = vmatprep.subr.bf16.mxu0 %v341
        %357 = vmatpush1.bf16.xpose.msra.mxu0 %v340
        %358 = vmatprep.subr.bf16.mxu0 0
        %359 = vmatpush1.bf16.xpose.msra.mxu0 0
        %360 = vmatprep.subr.bf16.mxu0 0
        %361 = vmatpush1.bf16.xpose.msra.mxu0 0
        %362 = vmatprep.subr.bf16.mxu0 0
        %363 = vmatpush1.bf16.xpose.msra.mxu0 0
        %364 = vmatprep.subr.bf16.mxu0 0
        %365 = vmatpush1.bf16.xpose.msra.mxu0 0
        %366 = vmatprep.subr.bf16.mxu0 0
        %367 = vmatpush1.bf16.xpose.msra.mxu0 0
        %368 = vmatprep.subr.bf16.mxu0 0
        %369 = vmatpush1.bf16.xpose.msra.mxu0 0
        %370 = vmatprep.subr.bf16.mxu0 0
        %371 = vmatpush1.bf16.xpose.msra.mxu0 0
        %372 = vmatprep.subr.bf16.mxu0 0
        %373 = vmatpush1.bf16.xpose.msra.mxu0 0
        %374 = vmatprep.subr.bf16.mxu0 0
        %375 = vmatpush1.bf16.xpose.msra.mxu0 0
        %376 = vmatprep.subr.bf16.mxu0 0
        %377 = vmatpush1.bf16.xpose.msra.mxu0 0
        %378 = vmatprep.subr.bf16.mxu0 0
        %379 = vmatpush1.bf16.xpose.msra.mxu0 0
        %380 = vmatprep.subr.bf16.mxu0 0
        %381 = vmatpush1.bf16.xpose.msra.mxu0 0
        %382 = vmatprep.mubr.bf16.mxu0 %v301
        %383 = vmatmul.mubr.bf16.gmra.mrb[0].mxu0 %v300
        %v384 = vpop.f32.mrb[0].mxu0
        %v385 = vadd.f32 0.0, %v384
        %v386 = vpop.f32.mrb[0].mxu0
        %v387 = vpop.f32.mrb[0].mxu0
        %v388 = vpop.f32.mrb[0].mxu0
        %389 = vdwg.mxu0
        %v390 = vld [vmem:[%s2] sm:$0xf]
        %v391 = vpack.c.bf16 %v385, %v385
        %v392 = vld [vmem:[%s3] sm:$0xff]
        %394 = vset.pattern.permute.xlu0 0
        %395 = vperm.xlu0 %394, %v392
        %v396 = vpop.permute.xlu0 %395
        %vm398 = vcmask 64512
        %v400 = vsel %vm398, %v390, 0
        %vm402 = vcmask 1043456
        %v404 = vsel %vm402, %v391, 0
        %406 = vmatprep.subr.bf16.mxu0 0
        %407 = vmatpush1.bf16.msra.mxu0 %v404
        %408 = vmatprep.subr.bf16.mxu0 0
        %409 = vmatpush1.bf16.msra.mxu0 0
        %410 = vmatprep.subr.bf16.mxu0 0
        %411 = vmatpush1.bf16.msra.mxu0 0
        %412 = vmatprep.subr.bf16.mxu0 0
        %413 = vmatpush1.bf16.msra.mxu0 0
        %414 = vmatprep.subr.bf16.mxu0 0
        %415 = vmatpush1.bf16.msra.mxu0 0
        %416 = vmatprep.subr.bf16.mxu0 0
        %417 = vmatpush1.bf16.msra.mxu0 0
        %418 = vmatprep.subr.bf16.mxu0 0
        %419 = vmatpush1.bf16.msra.mxu0 0
        %420 = vmatprep.subr.bf16.mxu0 0
        %421 = vmatpush1.bf16.msra.mxu0 0
        %422 = vmatprep.subr.bf16.mxu0 0
        %423 = vmatpush1.bf16.msra.mxu0 0
        %424 = vmatprep.subr.bf16.mxu0 0
        %425 = vmatpush1.bf16.msra.mxu0 0
        %426 = vmatprep.subr.bf16.mxu0 0
        %427 = vmatpush1.bf16.msra.mxu0 0
        %428 = vmatprep.subr.bf16.mxu0 0
        %429 = vmatpush1.bf16.msra.mxu0 0
        %430 = vmatprep.subr.bf16.mxu0 0
        %431 = vmatpush1.bf16.msra.mxu0 0
        %432 = vmatprep.subr.bf16.mxu0 0
        %433 = vmatpush1.bf16.msra.mxu0 0
        %434 = vmatprep.subr.bf16.mxu0 0
        %435 = vmatpush1.bf16.msra.mxu0 0
        %436 = vmatprep.subr.bf16.mxu0 0
        %437 = vmatpush1.bf16.msra.mxu0 0
        %438 = vmatprep.mubr.bf16.mxu0 0
        %439 = vmatmul.mubr.bf16.gmra.mrb[0].mxu0 %v400
        %v440 = vpop.f32.mrb[0].mxu0
        %v441 = vadd.f32 %v396, %v440
        %v442 = vpop.f32.mrb[0].mxu0
        %v443 = vpop.f32.mrb[0].mxu0
        %v444 = vpop.f32.mrb[0].mxu0
        %445 = vdwg.mxu0
        %v446 = vmax.f32 %v441, 0.0
        %v447 = vld [vmem:[%s4] sm:$0xff]
        %v448 = vmul.f32 %v446, %v447
        %v449 = vpack.c.bf16 %v448, %v448
        %v450 = vld [vmem:[#allocation7] sm:$0xff]
        %v451 = vld [vmem:[#allocation7 + $0x8] sm:$0xff]
        %v452 = vld [vmem:[#allocation7 + $0x10] sm:$0xff]
        %v453 = vld [vmem:[#allocation7 + $0x18] sm:$0xff]
        %v454 = vld [vmem:[#allocation7 + $0x20] sm:$0xff]
        %v455 = vld [vmem:[#allocation7 + $0x28] sm:$0xff]
        %v456 = vld [vmem:[#allocation7 + $0x30] sm:$0xff]
        %v457 = vld [vmem:[#allocation7 + $0x38] sm:$0xff]
        %v466 = vunpack.c.l.b16 %v450
        %v467 = vunpack.c.h.b16 %v450
        %v468 = vunpack.c.l.b16 %v451
        %v469 = vunpack.c.h.b16 %v451
        %v470 = vunpack.c.l.b16 %v452
        %v471 = vunpack.c.h.b16 %v452
        %v472 = vunpack.c.l.b16 %v453
        %v473 = vunpack.c.h.b16 %v453
        %v474 = vunpack.c.l.b16 %v454
        %v475 = vunpack.c.h.b16 %v454
        %v476 = vunpack.c.l.b16 %v455
        %v477 = vunpack.c.h.b16 %v455
        %v478 = vunpack.c.l.b16 %v456
        %v479 = vunpack.c.h.b16 %v456
        %v480 = vunpack.c.l.b16 %v457
        %v481 = vunpack.c.h.b16 %v457
        %v482 = vpack.c.b16 %v468, %v466
        %v483 = vpack.c.b16 %v469, %v467
        %v484 = vpack.c.b16 %v472, %v470
        %v485 = vpack.c.b16 %v473, %v471
        %v486 = vpack.c.b16 %v476, %v474
        %v487 = vpack.c.b16 %v477, %v475
        %v488 = vpack.c.b16 %v480, %v478
        %v489 = vpack.c.b16 %v481, %v479
        %vm498 = vcmask 523264
        %v500 = vsel %vm498, %v449, 0
        %502 = vmatprep.subr.bf16.mxu0 %v483
        %503 = vmatpush1.bf16.msra.mxu0 %v482
        %504 = vmatprep.subr.bf16.mxu0 %v485
        %505 = vmatpush1.bf16.msra.mxu0 %v484
        %506 = vmatprep.subr.bf16.mxu0 %v487
        %507 = vmatpush1.bf16.msra.mxu0 %v486
        %508 = vmatprep.subr.bf16.mxu0 %v489
        %509 = vmatpush1.bf16.msra.mxu0 %v488
        %510 = vmatprep.subr.bf16.mxu0 0
        %511 = vmatpush1.bf16.msra.mxu0 0
        %512 = vmatprep.subr.bf16.mxu0 0
        %513 = vmatpush1.bf16.msra.mxu0 0
        %514 = vmatprep.subr.bf16.mxu0 0
        %515 = vmatpush1.bf16.msra.mxu0 0
        %516 = vmatprep.subr.bf16.mxu0 0
        %517 = vmatpush1.bf16.msra.mxu0 0
        %518 = vmatprep.subr.bf16.mxu0 0
        %519 = vmatpush1.bf16.msra.mxu0 0
        %520 = vmatprep.subr.bf16.mxu0 0
        %521 = vmatpush1.bf16.msra.mxu0 0
        %522 = vmatprep.subr.bf16.mxu0 0
        %523 = vmatpush1.bf16.msra.mxu0 0
        %524 = vmatprep.subr.bf16.mxu0 0
        %525 = vmatpush1.bf16.msra.mxu0 0
        %526 = vmatprep.subr.bf16.mxu0 0
        %527 = vmatpush1.bf16.msra.mxu0 0
        %528 = vmatprep.subr.bf16.mxu0 0
        %529 = vmatpush1.bf16.msra.mxu0 0
        %530 = vmatprep.subr.bf16.mxu0 0
        %531 = vmatpush1.bf16.msra.mxu0 0
        %532 = vmatprep.subr.bf16.mxu0 0
        %533 = vmatpush1.bf16.msra.mxu0 0
        %534 = vmatprep.mubr.bf16.mxu0 0
        %535 = vmatmul.mubr.bf16.gmra.mrb[0].mxu0 %v500
        %v536 = vpop.f32.mrb[0].mxu0
        %v537 = vadd.f32 0.0, %v536
        %v538 = vpop.f32.mrb[0].mxu0
        %v539 = vadd.f32 0.0, %v538
        %v540 = vpop.f32.mrb[0].mxu0
        %v541 = vpop.f32.mrb[0].mxu0
        %542 = vdwg.mxu0
        %543 = vst [vmem:[%s296] sm:$0xff] %v298
        %544 = vst [vmem:[%s296 + $0x8] sm:$0xff] %v299
        %545 = vst [vmem:[%s296 + $0x10] sm:$0xff] %v537
        %546 = vst [vmem:[%s296 + $0x18] sm:$0xff] %v539
        %s547 = sand.u32 %s163, 1
        %s548 = scalar_lea.sflag [#allocation4], %s547
        %s549 = sand.u32 %s163, 1
        %s550 = smul.addr %s549, 32
        %s551 = scalar_lea.vmem [#allocation8], %s550
        // Predicated region
        $region57: #{tpu_custom_call.1} parent=43 // pred_check
          %p552 = pneg %p173
        $region58: #{tpu_custom_call.1} parent=43 // pred_check_branch
          %554 = sbr.rel (%p552) target = $region60
        $region59: #{tpu_custom_call.1} parent=43 // pred_region
          %s556 = ssub.s32 512, 512
          %557 = vsyncadd %s548, %s556
          %s558 = smul.addr %s24, 4
          %s559 = smul.addr %s558, 128
          %s560 = scalar_lea.hbm %s6, %s559
          %s561 = sshll.u32 %s551, 4
          %s562 = int_to_ptr.vmem [resolvable:$true] %s561
          %567 = dma.vmem_to_hbm [thread:$0]  %s562, 512, %s560, %s548, 256, 256, 16
        $region60: #{tpu_custom_call.1} parent=43 // pred_fallthru
          _
      $region44: #{tpu_custom_call.1} parent=5 // pred_fallthru
        _
      %p568 = scmp.le.s32.totalorder 2, %s19
      // Predicated region
      $region61: #{tpu_custom_call.1} parent=5 // pred_check
        %p569 = pneg %p568
      $region62: #{tpu_custom_call.1} parent=5 // pred_check_branch
        %571 = sbr.rel (%p569) target = $region64
      $region63: #{tpu_custom_call.1} parent=5 // pred_region
        %s572 = ssub.s32 %s19, 2
        // Predicated region
        $region65: #{tpu_custom_call.1} parent=63 // pred_check
          %p573 = pneg %p179
        $region66: #{tpu_custom_call.1} parent=63 // pred_check_branch
          %575 = sbr.rel (%p573) target = $region68
        $region67: #{tpu_custom_call.1} parent=63 // pred_region
          %s576 = sand.u32 %s164, 1
          %s577 = scalar_lea.sflag [#allocation4], %s576
          %s578 = sand.u32 %s164, 1
          %s579 = smul.addr %s578, 32
          %s580 = scalar_lea.vmem [#allocation8], %s579
          %581 = dma.done %s577, 512
        $region68: #{tpu_custom_call.1} parent=63 // pred_fallthru
          _
      $region64: #{tpu_custom_call.1} parent=5 // pred_fallthru
        _
    $region6: #{tpu_custom_call.1} parent=1 // loop_footer
      %s23 = sadd.s32 1, %s19
    $region7: #{tpu_custom_call.1} parent=1 // loop_footer_branch
      %18 = sbr.rel target = $region3
    $region8: #{tpu_custom_call.1} parent=1 // loop_exit
      _
    %582 = vsyncpa [#allocation3], 1
    %s583 = scalar_lea.sflag [#allocation3], 1
    %584 = vsyncpa %s583, 1
    %585 = vsyncpa [#allocation6], 1
    %586 = vsyncpa [#allocation4], 1
    %s587 = scalar_lea.sflag [#allocation4], 1
    %588 = vsyncpa %s587, 1

// kernel: tpu_custom_call.1
$region0: #{tpu_custom_call.1}
  #allocation0 [shape = 'u32[]', space=smem, size = 0x4, offset = 0x4, fixed_abs, tag = 'smem constant byte address 0x4 - core index']
  #allocation1 [shape = 'u32[144,128]{1,0:T(1,128)}', space=vmem, size = 0x12000, scoped, tag = 'internal scratch']
  %s0 = inlined_call_operand.hbm [shape: f32[2,8,256], index: 0, kind: input, shape index: {}]
  %s1 = inlined_call_operand.hbm [shape: bf16[64,256], index: 1, kind: input, shape index: {}]
  %s2 = inlined_call_operand.vmem [shape: bf16[8,8], index: 2, kind: input, shape index: {}]
  %s3 = inlined_call_operand.vmem [shape: f32[8,1], index: 3, kind: input, shape index: {}]
  %s4 = inlined_call_operand.vmem [shape: f32[8,64], index: 4, kind: input, shape index: {}]
  %s5 = inlined_call_operand.hbm [shape: bf16[64,256], index: 5, kind: input, shape index: {}]
  %s6 = inlined_call_operand.hbm [shape: f32[2,16,256], index: 6, kind: output, shape index: {}]
  %s7 = sld [smem:[#allocation0]]
  $region69: #{tpu_custom_call.1} parent=0
    _
  %s9 = ssub.s32 1, %s7
  %s10 = scalar_select 0, %s9, %s7
  $region1: #{tpu_custom_call.1} parent=0
    #allocation2 [shape = 'u8[16384]{0}', space=vmem, size = 0x4000, scoped, tag = 'input window, operand 0']
    #allocation3 [shape = 's32[2]{0}', space=sflag, size = 0x8, scoped, tag = 'scoped memory for tpu_custom_call.1']
    #allocation4 [shape = 's32[2]{0}', space=sflag, size = 0x8, scoped, tag = 'scoped memory for tpu_custom_call.1']
    #allocation5 [shape = 'u8[32768]{0}', space=vmem, size = 0x8000, scoped, tag = 'input window, operand 1, single buffered']
    #allocation6 [shape = 's32[1]{0}', space=sflag, size = 0x4, scoped, tag = 'scoped memory for tpu_custom_call.1']
    #allocation7 [shape = 'u8[32768]{0}', space=vmem, size = 0x8000, scoped, tag = 'input window, operand 5, single buffered']
    #allocation8 [shape = 'u8[32768]{0}', space=vmem, size = 0x8000, scoped, tag = 'output window, operand 0']
    %11 = vsyncpa [#allocation3], 0
    %s12 = scalar_lea.sflag [#allocation3], 1
    %13 = vsyncpa %s12, 0
    %14 = vsyncpa [#allocation6], 0
    %15 = vsyncpa [#allocation4], 0
    %s16 = scalar_lea.sflag [#allocation4], 1
    %17 = vsyncpa %s16, 0
    loop: start=0, step=1, limit=4
    $region2: #{tpu_custom_call.1} parent=1 // loop_pre_header
      _
    $region3: #{tpu_custom_call.1} parent=1 // loop_header
      %s19 = sphi 0, %s23
      %p20 = scmp.ge.s32.totalorder %s19, 4
      %s29 = sphi 0, %s31
      %s32 = sphi 0, %s29
      %s33 = sphi 0, %s32
      %s49 = sphi 0, %s33
      %s53 = sphi 0, %s53
      %s55 = sphi 0, %s53
      %s56 = sphi 0, %s55
      %s70 = sphi 0, %s56
      %s74 = sphi 0, %s74
      %s76 = sphi 0, %s74
      %s77 = sphi 0, %s76
      %s91 = sphi 0, %s77
      %s95 = sphi 0, %s95
      %s97 = sphi 0, %s95
      %s98 = sphi 0, %s97
      %s112 = sphi 0, %s98
      %s116 = sphi 0, %s116
      %s118 = sphi 0, %s116
      %s119 = sphi 0, %s118
      %s133 = sphi 0, %s119
      %s137 = sphi 0, %s137
      %s139 = sphi 0, %s137
      %s140 = sphi 0, %s139
      %s154 = sphi 0, %s140
      %s160 = sphi 0, %s162
      %s163 = sphi 0, %s160
      %s164 = sphi 0, %s163
      %s180 = sphi 0, %s164
    $region4: #{tpu_custom_call.1} parent=1 // loop_header_branch
      %22 = sbr.rel (%p20) target = $region8
    $region5: #{tpu_custom_call.1} parent=1 // loop_body
      %s24 = ssub.s32 %s19, 1
      %s25 = ssub.s32 %s19, 2
      %s26 = sadd.s32 %s19, 1
      %s27 = ssub.s32 %s19, %s26
      %p28 = scmp.eq.s32.totalorder %s27, 0
      %s30 = sadd.s32 %s29, 1
      %s31 = scalar_select %p28, %s29, %s30
      %p34 = pneg %p28
      %p35 = scmp.eq.s32.totalorder %s19, 1
      %p36 = por %p34, %p35
      %p37 = scmp.ne.s32.totalorder %s29, %s32
      %p38 = scmp.eq.s32.totalorder %s19, 0
      %p39 = por %p37, %p38
      %p40 = scmp.ne.s32.totalorder %s29, %s32
      %p41 = scmp.eq.s32.totalorder %s24, 1
      %p42 = por %p40, %p41
      %p43 = scmp.ne.s32.totalorder %s32, %s33
      %p44 = scmp.eq.s32.totalorder %s24, 0
      %p45 = por %p43, %p44
      %p46 = scmp.ne.s32.totalorder %s32, %s33
      %p47 = scmp.eq.s32.totalorder %s25, 1
      %p48 = por %p46, %p47
      %p50 = scmp.ne.s32.totalorder %s33, %s49
      %p51 = scmp.eq.s32.totalorder %s25, 0
      %p52 = por %p50, %p51
      %s54 = sadd.s32 %s53, 1
      %p57 = scmp.eq.s32.totalorder %s19, 1
      %p58 = scmp.ne.s32.totalorder %s53, %s55
      %p59 = scmp.eq.s32.totalorder %s19, 0
      %p60 = por %p58, %p59
      %p61 = scmp.ne.s32.totalorder %s53, %s55
      %p62 = scmp.eq.s32.totalorder %s24, 1
      %p63 = por %p61, %p62
      %p64 = scmp.ne.s32.totalorder %s55, %s56
      %p65 = scmp.eq.s32.totalorder %s24, 0
      %p66 = por %p64, %p65
      %p67 = scmp.ne.s32.totalorder %s55, %s56
      %p68 = scmp.eq.s32.totalorder %s25, 1
      %p69 = por %p67, %p68
      %p71 = scmp.ne.s32.totalorder %s56, %s70
      %p72 = scmp.eq.s32.totalorder %s25, 0
      %p73 = por %p71, %p72
      %s75 = sadd.s32 %s74, 1
      %p78 = scmp.eq.s32.totalorder %s19, 1
      %p79 = scmp.ne.s32.totalorder %s74, %s76
      %p80 = scmp.eq.s32.totalorder %s19, 0
      %p81 = por %p79, %p80
      %p82 = scmp.ne.s32.totalorder %s74, %s76
      %p83 = scmp.eq.s32.totalorder %s24, 1
      %p84 = por %p82, %p83
      %p85 = scmp.ne.s32.totalorder %s76, %s77
      %p86 = scmp.eq.s32.totalorder %s24, 0
      %p87 = por %p85, %p86
      %p88 = scmp.ne.s32.totalorder %s76, %s77
      %p89 = scmp.eq.s32.totalorder %s25, 1
      %p90 = por %p88, %p89
      %p92 = scmp.ne.s32.totalorder %s77, %s91
      %p93 = scmp.eq.s32.totalorder %s25, 0
      %p94 = por %p92, %p93
      %s96 = sadd.s32 %s95, 1
      %p99 = scmp.eq.s32.totalorder %s19, 1
      %p100 = scmp.ne.s32.totalorder %s95, %s97
      %p101 = scmp.eq.s32.totalorder %s19, 0
      %p102 = por %p100, %p101
      %p103 = scmp.ne.s32.totalorder %s95, %s97
      %p104 = scmp.eq.s32.totalorder %s24, 1
      %p105 = por %p103, %p104
      %p106 = scmp.ne.s32.totalorder %s97, %s98
      %p107 = scmp.eq.s32.totalorder %s24, 0
      %p108 = por %p106, %p107
      %p109 = scmp.ne.s32.totalorder %s97, %s98
      %p110 = scmp.eq.s32.totalorder %s25, 1
      %p111 = por %p109, %p110
      %p113 = scmp.ne.s32.totalorder %s98, %s112
      %p114 = scmp.eq.s32.totalorder %s25, 0
      %p115 = por %p113, %p114
      %s117 = sadd.s32 %s116, 1
      %p120 = scmp.eq.s32.totalorder %s19, 1
      %p121 = scmp.ne.s32.totalorder %s116, %s118
      %p122 = scmp.eq.s32.totalorder %s19, 0
      %p123 = por %p121, %p122
      %p124 = scmp.ne.s32.totalorder %s116, %s118
      %p125 = scmp.eq.s32.totalorder %s24, 1
      %p126 = por %p124, %p125
      %p127 = scmp.ne.s32.totalorder %s118, %s119
      %p128 = scmp.eq.s32.totalorder %s24, 0
      %p129 = por %p127, %p128
      %p130 = scmp.ne.s32.totalorder %s118, %s119
      %p131 = scmp.eq.s32.totalorder %s25, 1
      %p132 = por %p130, %p131
      %p134 = scmp.ne.s32.totalorder %s119, %s133
      %p135 = scmp.eq.s32.totalorder %s25, 0
      %p136 = por %p134, %p135
      %s138 = sadd.s32 %s137, 1
      %p141 = scmp.eq.s32.totalorder %s19, 1
      %p142 = scmp.ne.s32.totalorder %s137, %s139
      %p143 = scmp.eq.s32.totalorder %s19, 0
      %p144 = por %p142, %p143
      %p145 = scmp.ne.s32.totalorder %s137, %s139
      %p146 = scmp.eq.s32.totalorder %s24, 1
      %p147 = por %p145, %p146
      %p148 = scmp.ne.s32.totalorder %s139, %s140
      %p149 = scmp.eq.s32.totalorder %s24, 0
      %p150 = por %p148, %p149
      %p151 = scmp.ne.s32.totalorder %s139, %s140
      %p152 = scmp.eq.s32.totalorder %s25, 1
      %p153 = por %p151, %p152
      %p155 = scmp.ne.s32.totalorder %s140, %s154
      %p156 = scmp.eq.s32.totalorder %s25, 0
      %p157 = por %p155, %p156
      %s158 = ssub.s32 %s19, %s26
      %p159 = scmp.eq.s32.totalorder %s158, 0
      %s161 = sadd.s32 %s160, 1
      %s162 = scalar_select %p159, %s160, %s161
      %p165 = pneg %p159
      %p166 = scmp.eq.s32.totalorder %s19, 1
      %p167 = por %p165, %p166
      %p168 = scmp.ne.s32.totalorder %s160, %s163
      %p169 = scmp.eq.s32.totalorder %s19, 0
      %p170 = por %p168, %p169
      %p171 = scmp.ne.s32.totalorder %s160, %s163
      %p172 = scmp.eq.s32.totalorder %s24, 1
      %p173 = por %p171, %p172
      %p174 = scmp.ne.s32.totalorder %s163, %s164
      %p175 = scmp.eq.s32.totalorder %s24, 0
      %p176 = por %p174, %p175
      %p177 = scmp.ne.s32.totalorder %s163, %s164
      %p178 = scmp.eq.s32.totalorder %s25, 1
      %p179 = por %p177, %p178
      %p181 = scmp.ne.s32.totalorder %s164, %s180
      %p182 = scmp.eq.s32.totalorder %s25, 0
      %p183 = por %p181, %p182
      %p184 = scmp.le.s32.totalorder 1, %s19
      %p185 = scmp.lt.s32.totalorder %s19, 3
      %p186 = pnand %p184, %p185
      %p187 = pneg %p186
      // Predicated region
      $region9: #{tpu_custom_call.1} parent=5 // pred_check
        _
      $region10: #{tpu_custom_call.1} parent=5 // pred_check_branch
        %189 = sbr.rel (%p186) target = $region12
      $region11: #{tpu_custom_call.1} parent=5 // pred_region
        %s190 = ssub.s32 %s19, 1
        // Predicated region
        $region13: #{tpu_custom_call.1} parent=11 // pred_check
          %p191 = pneg %p66
        $region14: #{tpu_custom_call.1} parent=11 // pred_check_branch
          %193 = sbr.rel (%p191) target = $region16
        $region15: #{tpu_custom_call.1} parent=11 // pred_region
          %s195 = ssub.s32 1024, 1024
          %196 = vsyncadd [#allocation6], %s195
          %s197 = sshll.u32 [#allocation5], 4
          %s198 = int_to_ptr.vmem [resolvable:$true] %s197
          %203 = dma.hbm_to_vmem [thread:$0]  %s1, 1024, %s198, [#allocation6], 128, 128, 8
        $region16: #{tpu_custom_call.1} parent=11 // pred_fallthru
          _
        // Predicated region
        $region17: #{tpu_custom_call.1} parent=11 // pred_check
          %p204 = pneg %p87
        $region18: #{tpu_custom_call.1} parent=11 // pred_check_branch
          %206 = sbr.rel (%p204) target = $region20
        $region19: #{tpu_custom_call.1} parent=11 // pred_region
          _
        $region20: #{tpu_custom_call.1} parent=11 // pred_fallthru
          _
        // Predicated region
        $region21: #{tpu_custom_call.1} parent=11 // pred_check
          %p207 = pneg %p108
        $region22: #{tpu_custom_call.1} parent=11 // pred_check_branch
          %209 = sbr.rel (%p207) target = $region24
        $region23: #{tpu_custom_call.1} parent=11 // pred_region
          _
        $region24: #{tpu_custom_call.1} parent=11 // pred_fallthru
          _
        // Predicated region
        $region25: #{tpu_custom_call.1} parent=11 // pred_check
          %p210 = pneg %p129
        $region26: #{tpu_custom_call.1} parent=11 // pred_check_branch
          %212 = sbr.rel (%p210) target = $region28
        $region27: #{tpu_custom_call.1} parent=11 // pred_region
          _
        $region28: #{tpu_custom_call.1} parent=11 // pred_fallthru
          _
        // Predicated region
        $region29: #{tpu_custom_call.1} parent=11 // pred_check
          %p213 = pneg %p150
        $region30: #{tpu_custom_call.1} parent=11 // pred_check_branch
          %215 = sbr.rel (%p213) target = $region32
        $region31: #{tpu_custom_call.1} parent=11 // pred_region
          %s217 = ssub.s32 1024, 1024
          %218 = vsyncadd [#allocation6], %s217
          %s219 = sshll.u32 [#allocation7], 4
          %s220 = int_to_ptr.vmem [resolvable:$true] %s219
          %225 = dma.hbm_to_vmem [thread:$0]  %s5, 1024, %s220, [#allocation6], 128, 128, 8
        $region32: #{tpu_custom_call.1} parent=11 // pred_fallthru
          _
      $region12: #{tpu_custom_call.1} parent=5 // pred_fallthru
        _
      %p226 = scmp.lt.s32.totalorder %s19, 2
      // Predicated region
      $region33: #{tpu_custom_call.1} parent=5 // pred_check
        %p227 = pneg %p226
      $region34: #{tpu_custom_call.1} parent=5 // pred_check_branch
        %229 = sbr.rel (%p227) target = $region36
      $region35: #{tpu_custom_call.1} parent=5 // pred_region
        // Predicated region
        $region37: #{tpu_custom_call.1} parent=35 // pred_check
          %p230 = pneg %p39
        $region38: #{tpu_custom_call.1} parent=35 // pred_check_branch
          %232 = sbr.rel (%p230) target = $region40
        $region39: #{tpu_custom_call.1} parent=35 // pred_region
          %s233 = sand.u32 %s29, 1
          %s234 = scalar_lea.sflag [#allocation3], %s233
          %s235 = sand.u32 %s29, 1
          %s236 = smul.addr %s235, 16
          %s237 = scalar_lea.vmem [#allocation2], %s236
          %s239 = ssub.s32 256, 256
          %240 = vsyncadd %s234, %s239
          %s241 = smul.addr %s19, 2
          %s242 = smul.addr %s241, 128
          %s243 = scalar_lea.hbm %s0, %s242
          %s245 = sshll.u32 %s237, 4
          %s246 = int_to_ptr.vmem [resolvable:$true] %s245
          %248 = dma.hbm_to_vmem [thread:$0]  %s243, 256, %s246, %s234
        $region40: #{tpu_custom_call.1} parent=35 // pred_fallthru
          _
      $region36: #{tpu_custom_call.1} parent=5 // pred_fallthru
        _
      %p249 = scmp.le.s32.totalorder 1, %s19
      %p250 = scmp.lt.s32.totalorder %s19, 3
      %p251 = pnand %p249, %p250
      %p252 = pneg %p251
      // Predicated region
      $region41: #{tpu_custom_call.1} parent=5 // pred_check
        _
      $region42: #{tpu_custom_call.1} parent=5 // pred_check_branch
        %254 = sbr.rel (%p251) target = $region44
      $region43: #{tpu_custom_call.1} parent=5 // pred_region
        %s255 = ssub.s32 %s19, 1
        %s256 = sand.u32 %s32, 1
        %s257 = scalar_lea.sflag [#allocation3], %s256
        %s258 = sand.u32 %s32, 1
        %s259 = smul.addr %s258, 16
        %s260 = scalar_lea.vmem [#allocation2], %s259
        // Predicated region
        $region45: #{tpu_custom_call.1} parent=43 // pred_check
          %p261 = pneg %p45
        $region46: #{tpu_custom_call.1} parent=43 // pred_check_branch
          %263 = sbr.rel (%p261) target = $region48
        $region47: #{tpu_custom_call.1} parent=43 // pred_region
          %264 = dma.done %s257, 256
        $region48: #{tpu_custom_call.1} parent=43 // pred_fallthru
          _
        // Predicated region
        $region49: #{tpu_custom_call.1} parent=43 // pred_check
          %p265 = pneg %p66
        $region50: #{tpu_custom_call.1} parent=43 // pred_check_branch
          %267 = sbr.rel (%p265) target = $region52
        $region51: #{tpu_custom_call.1} parent=43 // pred_region
          %268 = dma.done [#allocation6], 1024
        $region52: #{tpu_custom_call.1} parent=43 // pred_fallthru
          _
        // Predicated region
        $region53: #{tpu_custom_call.1} parent=43 // pred_check
          %p269 = pneg %p150
        $region54: #{tpu_custom_call.1} parent=43 // pred_check_branch
          %271 = sbr.rel (%p269) target = $region56
        $region55: #{tpu_custom_call.1} parent=43 // pred_region
          %272 = dma.done [#allocation6], 1024
        $region56: #{tpu_custom_call.1} parent=43 // pred_fallthru
          _
        %s273 = sand.u32 %s32, 1
        %s274 = scalar_lea.sflag [#allocation3], %s273
        %s275 = sand.u32 %s32, 1
        %s276 = smul.addr %s275, 16
        %s277 = scalar_lea.vmem [#allocation2], %s276
        %p278 = pneg %p45
        %p279 = pneg %p42
        %p280 = pneg %p66
        %p281 = pneg %p63
        %p282 = pneg %p87
        %p283 = pneg %p84
        %p284 = pneg %p108
        %p285 = pneg %p105
        %p286 = pneg %p129
        %p287 = pneg %p126
        %p288 = pneg %p150
        %p289 = pneg %p147
        %p290 = pneg %p176
        %p291 = pneg %p173
        %s292 = sand.u32 %s163, 1
        %s293 = scalar_lea.sflag [#allocation4], %s292
        %s294 = sand.u32 %s163, 1
        %s295 = smul.addr %s294, 32
        %s296 = scalar_lea.vmem [#allocation8], %s295
        %v298 = vld [vmem:[%s260] sm:$0xff]
        %v299 = vld [vmem:[%s260 + $0x8] sm:$0xff]
        %v300 = vpack.c.bf16 %v298, %v298
        %v301 = vpack.c.bf16 %v299, %v299
        %v302 = vld [vmem:[#allocation5] sm:$0xff]
        %v303 = vld [vmem:[#allocation5 + $0x8] sm:$0xff]
        %v304 = vld [vmem:[#allocation5 + $0x10] sm:$0xff]
        %v305 = vld [vmem:[#allocation5 + $0x18] sm:$0xff]
        %v306 = vld [vmem:[#allocation5 + $0x20] sm:$0xff]
        %v307 = vld [vmem:[#allocation5 + $0x28] sm:$0xff]
        %v308 = vld [vmem:[#allocation5 + $0x30] sm:$0xff]
        %v309 = vld [vmem:[#allocation5 + $0x38] sm:$0xff]
        %v318 = vunpack.c.l.b16 %v302
        %v319 = vunpack.c.h.b16 %v302
        %v320 = vunpack.c.l.b16 %v303
        %v321 = vunpack.c.h.b16 %v303
        %v322 = vunpack.c.l.b16 %v304
        %v323 = vunpack.c.h.b16 %v304
        %v324 = vunpack.c.l.b16 %v305
        %v325 = vunpack.c.h.b16 %v305
        %v326 = vunpack.c.l.b16 %v306
        %v327 = vunpack.c.h.b16 %v306
        %v328 = vunpack.c.l.b16 %v307
        %v329 = vunpack.c.h.b16 %v307
        %v330 = vunpack.c.l.b16 %v308
        %v331 = vunpack.c.h.b16 %v308
        %v332 = vunpack.c.l.b16 %v309
        %v333 = vunpack.c.h.b16 %v309
        %v334 = vpack.c.b16 %v320, %v318
        %v335 = vpack.c.b16 %v321, %v319
        %v336 = vpack.c.b16 %v324, %v322
        %v337 = vpack.c.b16 %v325, %v323
        %v338 = vpack.c.b16 %v328, %v326
        %v339 = vpack.c.b16 %v329, %v327
        %v340 = vpack.c.b16 %v332, %v330
        %v341 = vpack.c.b16 %v333, %v331
        %350 = vmatprep.subr.bf16.mxu0 %v335
        %351 = vmatpush1.bf16.xpose.msra.mxu0 %v334
        %352 = vmatprep.subr.bf16.mxu0 %v337
        %353 = vmatpush1.bf16.xpose.msra.mxu0 %v336
        %354 = vmatprep.subr.bf16.mxu0 %v339
        %355 = vmatpush1.bf16.xpose.msra.mxu0 %v338
        %356 = vmatprep.subr.bf16.mxu0 %v341
        %357 = vmatpush1.bf16.xpose.msra.mxu0 %v340
        %358 = vmatprep.subr.bf16.mxu0 0
        %359 = vmatpush1.bf16.xpose.msra.mxu0 0
        %360 = vmatprep.subr.bf16.mxu0 0
        %361 = vmatpush1.bf16.xpose.msra.mxu0 0
        %362 = vmatprep.subr.bf16.mxu0 0
        %363 = vmatpush1.bf16.xpose.msra.mxu0 0
        %364 = vmatprep.subr.bf16.mxu0 0
        %365 = vmatpush1.bf16.xpose.msra.mxu0 0
        %366 = vmatprep.subr.bf16.mxu0 0
        %367 = vmatpush1.bf16.xpose.msra.mxu0 0
        %368 = vmatprep.subr.bf16.mxu0 0
        %369 = vmatpush1.bf16.xpose.msra.mxu0 0
        %370 = vmatprep.subr.bf16.mxu0 0
        %371 = vmatpush1.bf16.xpose.msra.mxu0 0
        %372 = vmatprep.subr.bf16.mxu0 0
        %373 = vmatpush1.bf16.xpose.msra.mxu0 0
        %374 = vmatprep.subr.bf16.mxu0 0
        %375 = vmatpush1.bf16.xpose.msra.mxu0 0
        %376 = vmatprep.subr.bf16.mxu0 0
        %377 = vmatpush1.bf16.xpose.msra.mxu0 0
        %378 = vmatprep.subr.bf16.mxu0 0
        %379 = vmatpush1.bf16.xpose.msra.mxu0 0
        %380 = vmatprep.subr.bf16.mxu0 0
        %381 = vmatpush1.bf16.xpose.msra.mxu0 0
        %382 = vmatprep.mubr.bf16.mxu0 %v301
        %383 = vmatmul.mubr.bf16.gmra.mrb[0].mxu0 %v300
        %v384 = vpop.f32.mrb[0].mxu0
        %v385 = vadd.f32 0.0, %v384
        %v386 = vpop.f32.mrb[0].mxu0
        %v387 = vpop.f32.mrb[0].mxu0
        %v388 = vpop.f32.mrb[0].mxu0
        %389 = vdwg.mxu0
        %v390 = vld [vmem:[%s2] sm:$0xf]
        %v391 = vpack.c.bf16 %v385, %v385
        %v392 = vld [vmem:[%s3] sm:$0xff]
        %394 = vset.pattern.permute.xlu0 0
        %395 = vperm.xlu0 %394, %v392
        %v396 = vpop.permute.xlu0 %395
        %vm398 = vcmask 64512
        %v400 = vsel %vm398, %v390, 0
        %vm402 = vcmask 1043456
        %v404 = vsel %vm402, %v391, 0
        %406 = vmatprep.subr.bf16.mxu0 0
        %407 = vmatpush1.bf16.msra.mxu0 %v404
        %408 = vmatprep.subr.bf16.mxu0 0
        %409 = vmatpush1.bf16.msra.mxu0 0
        %410 = vmatprep.subr.bf16.mxu0 0
        %411 = vmatpush1.bf16.msra.mxu0 0
        %412 = vmatprep.subr.bf16.mxu0 0
        %413 = vmatpush1.bf16.msra.mxu0 0
        %414 = vmatprep.subr.bf16.mxu0 0
        %415 = vmatpush1.bf16.msra.mxu0 0
        %416 = vmatprep.subr.bf16.mxu0 0
        %417 = vmatpush1.bf16.msra.mxu0 0
        %418 = vmatprep.subr.bf16.mxu0 0
        %419 = vmatpush1.bf16.msra.mxu0 0
        %420 = vmatprep.subr.bf16.mxu0 0
        %421 = vmatpush1.bf16.msra.mxu0 0
        %422 = vmatprep.subr.bf16.mxu0 0
        %423 = vmatpush1.bf16.msra.mxu0 0
        %424 = vmatprep.subr.bf16.mxu0 0
        %425 = vmatpush1.bf16.msra.mxu0 0
        %426 = vmatprep.subr.bf16.mxu0 0
        %427 = vmatpush1.bf16.msra.mxu0 0
        %428 = vmatprep.subr.bf16.mxu0 0
        %429 = vmatpush1.bf16.msra.mxu0 0
        %430 = vmatprep.subr.bf16.mxu0 0
        %431 = vmatpush1.bf16.msra.mxu0 0
        %432 = vmatprep.subr.bf16.mxu0 0
        %433 = vmatpush1.bf16.msra.mxu0 0
        %434 = vmatprep.subr.bf16.mxu0 0
        %435 = vmatpush1.bf16.msra.mxu0 0
        %436 = vmatprep.subr.bf16.mxu0 0
        %437 = vmatpush1.bf16.msra.mxu0 0
        %438 = vmatprep.mubr.bf16.mxu0 0
        %439 = vmatmul.mubr.bf16.gmra.mrb[0].mxu0 %v400
        %v440 = vpop.f32.mrb[0].mxu0
        %v441 = vadd.f32 %v396, %v440
        %v442 = vpop.f32.mrb[0].mxu0
        %v443 = vpop.f32.mrb[0].mxu0
        %v444 = vpop.f32.mrb[0].mxu0
        %445 = vdwg.mxu0
        %v446 = vmax.f32 %v441, 0.0
        %v447 = vld [vmem:[%s4] sm:$0xff]
        %v448 = vmul.f32 %v446, %v447
        %v449 = vpack.c.bf16 %v448, %v448
        %v450 = vld [vmem:[#allocation7] sm:$0xff]
        %v451 = vld [vmem:[#allocation7 + $0x8] sm:$0xff]
        %v452 = vld [vmem:[#allocation7 + $0x10] sm:$0xff]
        %v453 = vld [vmem:[#allocation7 + $0x18] sm:$0xff]
        %v454 = vld [vmem:[#allocation7 + $0x20] sm:$0xff]
        %v455 = vld [vmem:[#allocation7 + $0x28] sm:$0xff]
        %v456 = vld [vmem:[#allocation7 + $0x30] sm:$0xff]
        %v457 = vld [vmem:[#allocation7 + $0x38] sm:$0xff]
        %v466 = vunpack.c.l.b16 %v450
        %v467 = vunpack.c.h.b16 %v450
        %v468 = vunpack.c.l.b16 %v451
        %v469 = vunpack.c.h.b16 %v451
        %v470 = vunpack.c.l.b16 %v452
        %v471 = vunpack.c.h.b16 %v452
        %v472 = vunpack.c.l.b16 %v453
        %v473 = vunpack.c.h.b16 %v453
        %v474 = vunpack.c.l.b16 %v454
        %v475 = vunpack.c.h.b16 %v454
        %v476 = vunpack.c.l.b16 %v455
        %v477 = vunpack.c.h.b16 %v455
        %v478 = vunpack.c.l.b16 %v456
        %v479 = vunpack.c.h.b16 %v456
        %v480 = vunpack.c.l.b16 %v457
        %v481 = vunpack.c.h.b16 %v457
        %v482 = vpack.c.b16 %v468, %v466
        %v483 = vpack.c.b16 %v469, %v467
        %v484 = vpack.c.b16 %v472, %v470
        %v485 = vpack.c.b16 %v473, %v471
        %v486 = vpack.c.b16 %v476, %v474
        %v487 = vpack.c.b16 %v477, %v475
        %v488 = vpack.c.b16 %v480, %v478
        %v489 = vpack.c.b16 %v481, %v479
        %vm498 = vcmask 523264
        %v500 = vsel %vm498, %v449, 0
        %502 = vmatprep.subr.bf16.mxu0 %v483
        %503 = vmatpush1.bf16.msra.mxu0 %v482
        %504 = vmatprep.subr.bf16.mxu0 %v485
        %505 = vmatpush1.bf16.msra.mxu0 %v484
        %506 = vmatprep.subr.bf16.mxu0 %v487
        %507 = vmatpush1.bf16.msra.mxu0 %v486
        %508 = vmatprep.subr.bf16.mxu0 %v489
        %509 = vmatpush1.bf16.msra.mxu0 %v488
        %510 = vmatprep.subr.bf16.mxu0 0
        %511 = vmatpush1.bf16.msra.mxu0 0
        %512 = vmatprep.subr.bf16.mxu0 0
        %513 = vmatpush1.bf16.msra.mxu0 0
        %514 = vmatprep.subr.bf16.mxu0 0
        %515 = vmatpush1.bf16.msra.mxu0 0
        %516 = vmatprep.subr.bf16.mxu0 0
        %517 = vmatpush1.bf16.msra.mxu0 0
        %518 = vmatprep.subr.bf16.mxu0 0
        %519 = vmatpush1.bf16.msra.mxu0 0
        %520 = vmatprep.subr.bf16.mxu0 0
        %521 = vmatpush1.bf16.msra.mxu0 0
        %522 = vmatprep.subr.bf16.mxu0 0
        %523 = vmatpush1.bf16.msra.mxu0 0
        %524 = vmatprep.subr.bf16.mxu0 0
        %525 = vmatpush1.bf16.msra.mxu0 0
        %526 = vmatprep.subr.bf16.mxu0 0
        %527 = vmatpush1.bf16.msra.mxu0 0
        %528 = vmatprep.subr.bf16.mxu0 0
        %529 = vmatpush1.bf16.msra.mxu0 0
        %530 = vmatprep.subr.bf16.mxu0 0
        %531 = vmatpush1.bf16.msra.mxu0 0
        %532 = vmatprep.subr.bf16.mxu0 0
        %533 = vmatpush1.bf16.msra.mxu0 0
        %534 = vmatprep.mubr.bf16.mxu0 0
        %535 = vmatmul.mubr.bf16.gmra.mrb[0].mxu0 %v500
        %v536 = vpop.f32.mrb[0].mxu0
        %v537 = vadd.f32 0.0, %v536
        %v538 = vpop.f32.mrb[0].mxu0
        %v539 = vadd.f32 0.0, %v538
        %v540 = vpop.f32.mrb[0].mxu0
        %v541 = vpop.f32.mrb[0].mxu0
        %542 = vdwg.mxu0
        %543 = vst [vmem:[%s296] sm:$0xff] %v298
        %544 = vst [vmem:[%s296 + $0x8] sm:$0xff] %v299
        %545 = vst [vmem:[%s296 + $0x10] sm:$0xff] %v537
        %546 = vst [vmem:[%s296 + $0x18] sm:$0xff] %v539
        %s547 = sand.u32 %s163, 1
        %s548 = scalar_lea.sflag [#allocation4], %s547
        %s549 = sand.u32 %s163, 1
        %s550 = smul.addr %s549, 32
        %s551 = scalar_lea.vmem [#allocation8], %s550
        // Predicated region
        $region57: #{tpu_custom_call.1} parent=43 // pred_check
          %p552 = pneg %p173
        $region58: #{tpu_custom_call.1} parent=43 // pred_check_branch
          %554 = sbr.rel (%p552) target = $region60
        $region59: #{tpu_custom_call.1} parent=43 // pred_region
          %s556 = ssub.s32 512, 512
          %557 = vsyncadd %s548, %s556
          %s558 = smul.addr %s24, 4
          %s559 = smul.addr %s558, 128
          %s560 = scalar_lea.hbm %s6, %s559
          %s561 = sshll.u32 %s551, 4
          %s562 = int_to_ptr.vmem [resolvable:$true] %s561
          %567 = dma.vmem_to_hbm [thread:$0]  %s562, 512, %s560, %s548, 256, 256, 16
        $region60: #{tpu_custom_call.1} parent=43 // pred_fallthru
          _
      $region44: #{tpu_custom_call.1} parent=5 // pred_fallthru
        _
      %p568 = scmp.le.s32.totalorder 2, %s19
      // Predicated region
      $region61: #{tpu_custom_call.1} parent=5 // pred_check
        %p569 = pneg %p568
      $region62: #{tpu_custom_call.1} parent=5 // pred_check_branch
        %571 = sbr.rel (%p569) target = $region64
      $region63: #{tpu_custom_call.1} parent=5 // pred_region
        %s572 = ssub.s32 %s19, 2
        // Predicated region
        $region65: #{tpu_custom_call.1} parent=63 // pred_check
          %p573 = pneg %p179
        $region66: #{tpu_custom_call.1} parent=63 // pred_check_branch
          %575 = sbr.rel (%p573) target = $region68
        $region67: #{tpu_custom_call.1} parent=63 // pred_region
          %s576 = sand.u32 %s164, 1
          %s577 = scalar_lea.sflag [#allocation4], %s576
          %s578 = sand.u32 %s164, 1
          %s579 = smul.addr %s578, 32
          %s580 = scalar_lea.vmem [#allocation8], %s579
          %581 = dma.done %s577, 512
        $region68: #{tpu_custom_call.1} parent=63 // pred_fallthru
          _
      $region64: #{tpu_custom_call.1} parent=5 // pred_fallthru
        _
    $region6: #{tpu_custom_call.1} parent=1 // loop_footer
      %s23 = sadd.s32 1, %s19
    $region7: #{tpu_custom_call.1} parent=1 // loop_footer_branch
      %18 = sbr.rel target = $region3
    $region8: #{tpu_custom_call.1} parent=1 // loop_exit
      _
    %582 = vsyncpa [#allocation3], 1
    %s583 = scalar_lea.sflag [#allocation3], 1
    %584 = vsyncpa %s583, 1
    %585 = vsyncpa [#allocation6], 1
    %586 = vsyncpa [#allocation4], 1
    %s587 = scalar_lea.sflag [#allocation4], 1
    %588 = vsyncpa %s587, 1

</llo_original>
